<compile_context>
chip_gen: v5e
topology: v5e:2x2
jax: 0.10.0
libtpu: 0.0.40
codegen_flags: <defaults>
</compile_context>

<pallas_src>
import jax
import jax.numpy as jnp
from jax.experimental import pallas as pl
from jax.experimental.pallas import tpu as pltpu


def _sigmoid(x):
    # sigmoid(x) == 0.5 * (tanh(x/2) + 1): exact rewrite, one EUP tanh instead
    # of a possible exp + reciprocal pair.
    return 0.5 * (jnp.tanh(0.5 * x) + 1.0)


def lstm_chunk_kernel(pre_ref, wh_ref, out_ref, h_scr, c_scr):
    """One grid step = one batch tile x one chunk of TS timesteps.

    pre_ref : (BT, TS*6H) bf16  hoisted x/m/bias gate pre-activations
    wh_ref  : (H, 6H)     bf16  packed recurrent weight [i, o, f, u, ii, uu]
    out_ref : (BT, TS*H)  f32   hidden states for this chunk (lane-dense slab)
    h_scr   : (BT, H)     f32   recurrent hidden state (persists across grid)
    c_scr   : (BT, H)     f32   recurrent cell state   (persists across grid)
    """
    H = h_scr.shape[-1]
    G6 = 6 * H
    TS = pre_ref.shape[-1] // G6

    # Fresh recurrence at the first time chunk of every batch tile.
    # NOTE: only valid while axis 0 (batch) is the sole "parallel" axis and
    # axis 1 (time) stays the inner sequential axis.
    @pl.when(pl.program_id(1) == 0)
    def _():
        h_scr[...] = jnp.zeros_like(h_scr)
        c_scr[...] = jnp.zeros_like(c_scr)

    h = h_scr[...]                       # (BT, H) f32
    c = c_scr[...]                       # (BT, H) f32
    wh = wh_ref[...]                     # (H, 6H) bf16, resident / single-buffered

    for s in range(TS):                  # static unroll over the time chunk
        # Single MXU matmul per step (bf16 operands, f32 accumulation).
        zh = jnp.dot(h.astype(jnp.bfloat16), wh,
                     preferred_element_type=jnp.float32)           # (BT, 6H)
        # Per-step slice of the hoisted projections (bf16 -> f32 VPU add).
        g = zh + pre_ref[:, s * G6:(s + 1) * G6].astype(jnp.float32)

        i  = _sigmoid(g[:, 0 * H:1 * H])
        o  = _sigmoid(g[:, 1 * H:2 * H])
        f  = _sigmoid(g[:, 2 * H:3 * H])
        u  = jnp.tanh(g[:, 3 * H:4 * H])
        ii = _sigmoid(g[:, 4 * H:5 * H])
        uu = jnp.tanh(g[:, 5 * H:6 * H])

        # State update stays in f32.
        c = i * u + ii * uu + f * c
        h = o * jnp.tanh(c)

        # Per-step store: keeps only one step's h live and lets the output
        # buffer fill while later steps still compute.
        out_ref[:, s * H:(s + 1) * H] = h.astype(out_ref.dtype)

    h_scr[...] = h
    c_scr[...] = c


def _pick_batch_tile(B, max_tile=256):
    """Batch tile: divides B, fills the MXU M dimension (target up to
    `max_tile` rows), and yields >= 2 batch tiles when B allows so v7x's
    second TensorCore gets work. Multiples of 16 keep bf16 (16,128) sublane
    tiling clean for the pre-activation blocks."""
    assert B % 8 == 0
    if B % 32 == 0:
        bt = min(max_tile, B // 2)
        bt = max(16, (bt // 16) * 16)
        while B % bt:
            bt -= 16
        return bt
    return B


def my_lstm_forward(x, m, Wh, Wx, Wm, bias, time_chunk=8):
    """x: (B, T, I), m: (B, T, G) -> hidden_seq: (B, T, H).

    Packed parameters (equivalent to the six nn.Linear layers):
      Wh   : (H, 6H)  h-part of  [all1, all2, all3, all4, all11, all44]
      Wx   : (I, 4H)  x-part of  [all1, all2, all3, all4]
      Wm   : (G, 4H)  m-part of  [all2, all3, all11, all44]
      bias : (1, 6H)  biases of  [all1, all2, all3, all4, all11, all44]
    """
    B, T, I = x.shape
    G = m.shape[-1]
    H = Wh.shape[0]
    TS = time_chunk
    assert T % TS == 0, "time_chunk must divide the sequence length"
    assert B % 8 == 0, "batch must be a multiple of 8 (sublane tile)"
    # TODO(synk): pad H to a multiple of 128 for real model sizes so gate
    # slices and per-step stores are lane-aligned (plain vst, not masked).

    # ---- Hoisted input projections: two real GEMMs over all timesteps -------
    # (no zero-padded packed weight), scattered into the six gate slices
    # [i, o, f, u, ii, uu].
    px = x.reshape(B * T, I) @ Wx                      # (B*T, 4H): x-part of i,o,f,u
    pm = m.reshape(B * T, G) @ Wm                      # (B*T, 4H): m-part of o,f,ii,uu
    pre = jnp.concatenate([
        px[:, 0 * H:1 * H],                            # i
        px[:, 1 * H:2 * H] + pm[:, 0 * H:1 * H],       # o
        px[:, 2 * H:3 * H] + pm[:, 1 * H:2 * H],       # f
        px[:, 3 * H:4 * H],                            # u
        pm[:, 2 * H:3 * H],                            # ii
        pm[:, 3 * H:4 * H],                            # uu
    ], axis=-1) + bias                                 # (B*T, 6H) f32
    # bf16 halves the dominant HBM stream into the kernel (added before the
    # saturating sigmoid/tanh, so precision loss is negligible).
    pre = pre.astype(jnp.bfloat16).reshape(B, T * 6 * H)

    wh_bf16 = Wh.astype(jnp.bfloat16)

    BT = _pick_batch_tile(B)

    # ---- Explicit VMEM budget -----------------------------------------------
    # 2x double-buffered pre block + 2x double-buffered out block +
    # single-buffered weight + persistent (h, c) scratch, with headroom.
    pre_blk = BT * TS * 6 * H * 2          # bf16
    out_blk = BT * TS * H * 4              # f32
    wh_bytes = H * 6 * H * 2               # bf16, single-buffered
    scratch = 2 * BT * H * 4
    vmem_limit = int(1.5 * (2 * pre_blk + 2 * out_blk + wh_bytes + scratch)) + (4 << 20)
    vmem_limit = min(max(vmem_limit, 16 << 20), 128 << 20)
    # TODO(synk): for H >= 1024 on v7x (64 MiB VMEM) shrink TS or BT (not H),
    # and if Wh itself no longer fits, keep it in HBM (memory_space=pl.ANY)
    # and K-tile/DMA column panels inside each step (e.g. pltpu.emit_pipeline)
    # — an outer grid axis over the 6H output dim would break the recurrence.

    cost = pl.CostEstimate(
        flops=2 * B * T * H * 6 * H + 10 * B * T * H,
        transcendentals=7 * B * T * H,
        bytes_accessed=B * T * 6 * H * 2 + H * 6 * H * 2 + B * T * H * 4,
    )

    out2d = pl.pallas_call(
        lstm_chunk_kernel,
        out_shape=jax.ShapeDtypeStruct((B, T * H), jnp.float32),
        grid_spec=pltpu.PrefetchScalarGridSpec(
            num_scalar_prefetch=0,
            grid=(B // BT, T // TS),
            in_specs=[
                pl.BlockSpec((BT, TS * 6 * H), lambda b, k: (b, k)),
                # Constant index_map: double-buffering would only waste VMEM.
                pl.BlockSpec((H, 6 * H), lambda b, k: (0, 0),
                             pipeline_mode=pl.Buffered(1)),
            ],
            out_specs=pl.BlockSpec((BT, TS * H), lambda b, k: (b, k)),
            scratch_shapes=[
                pltpu.VMEM((BT, H), jnp.float32),  # ht
                pltpu.VMEM((BT, H), jnp.float32),  # Ct_x
            ],
        ),
        compiler_params=pltpu.CompilerParams(
            # batch tiles are independent ("parallel"); time is a recurrence.
            dimension_semantics=("parallel", "arbitrary"),
            vmem_limit_bytes=vmem_limit),
        cost_estimate=cost,
    )(pre, wh_bf16)

    return out2d.reshape(B, T, H)


def ref_forward(x, m, Wh, Wx, Wm, bias):
    """Pure-JAX f32 reference matching the PyTorch forward semantics.
    (Ct_m in the PyTorch module is carried but never updated or used.)"""
    B, T, _ = x.shape
    H = Wh.shape[0]
    ht = jnp.zeros((B, H), jnp.float32)
    ct = jnp.zeros((B, H), jnp.float32)
    outs = []
    for t in range(T):
        xt, mt = x[:, t], m[:, t]
        zh = ht @ Wh
        zx = xt @ Wx
        zm = mt @ Wm
        b = bias
        i  = jax.nn.sigmoid(zh[:, 0*H:1*H] + zx[:, 0*H:1*H] + b[:, 0*H:1*H])
        o  = jax.nn.sigmoid(zh[:, 1*H:2*H] + zx[:, 1*H:2*H] + zm[:, 0*H:1*H] + b[:, 1*H:2*H])
        f  = jax.nn.sigmoid(zh[:, 2*H:3*H] + zx[:, 2*H:3*H] + zm[:, 1*H:2*H] + b[:, 2*H:3*H])
        u  = jnp.tanh(       zh[:, 3*H:4*H] + zx[:, 3*H:4*H] + b[:, 3*H:4*H])
        ii = jax.nn.sigmoid(zh[:, 4*H:5*H] + zm[:, 2*H:3*H] + b[:, 4*H:5*H])
        uu = jnp.tanh(       zh[:, 5*H:6*H] + zm[:, 3*H:4*H] + b[:, 5*H:6*H])
        ct = i * u + ii * uu + f * ct
        ht = o * jnp.tanh(ct)
        outs.append(ht)
    return jnp.stack(outs, axis=1)


if __name__ == "__main__":
    B, T = 8, 16
    INPUT_SZ, HIDDEN_SZ, G_SZ = 16, 32, 8
    H = HIDDEN_SZ

    key = jax.random.PRNGKey(0)
    kx, km, k1, k2, k3, k4 = jax.random.split(key, 6)

    x = jax.random.normal(kx, (B, T, INPUT_SZ), jnp.float32)
    m = jax.random.normal(km, (B, T, G_SZ), jnp.float32)

    # Deterministic parameter init (packed equivalents of the six nn.Linear layers).
    scale = 0.1
    Wh   = scale * jax.random.normal(k1, (H, 6 * H), jnp.float32)
    Wx   = scale * jax.random.normal(k2, (INPUT_SZ, 4 * H), jnp.float32)
    Wm   = scale * jax.random.normal(k3, (G_SZ, 4 * H), jnp.float32)
    bias = scale * jax.random.normal(k4, (1, 6 * H), jnp.float32)

    fwd = jax.jit(my_lstm_forward, static_argnames=("time_chunk",))
    out = jax.block_until_ready(fwd(x, m, Wh, Wx, Wm, bias, time_chunk=8))
    ref = ref_forward(x, m, Wh, Wx, Wm, bias)

    assert out.shape == (B, T, H)
    # Tolerance accounts for bf16 MXU operands on the recurrent matmul and the
    # bf16 hoisted pre-activations (f32 accumulation / state). Note: bf16
    # recurrence error can compound for very long sequences; keep an f32
    # validation path if T grows to hundreds of steps.
    assert jnp.allclose(out, ref, atol=5e-2, rtol=5e-2), "mismatch vs JAX reference"
    print("KERNEL_OK")
</pallas_src>

<mosaic_0001>
module attributes {stable_mosaic.version = 11 : i64} {
  func.func @lstm_chunk_kernel(%arg0: i32, %arg1: i32, %arg2: memref<8x1536xbf16, #tpu.memory_space<vmem>>, %arg3: memref<32x192xbf16, #tpu.memory_space<vmem>>, %arg4: memref<8x256xf32, #tpu.memory_space<vmem>>, %arg5: memref<8x32xf32, #tpu.memory_space<vmem>>, %arg6: memref<8x32xf32, #tpu.memory_space<vmem>>) attributes {dimension_semantics = [#tpu.dimension_semantics<parallel>, #tpu.dimension_semantics<arbitrary>], iteration_bounds = array<i64: 1, 2>, scalar_prefetch = 0 : i64, scratch_operands = 2 : i64, tpu.core_type = #tpu.core_type<tc>, window_params = [{transform_indices = @transform_0, window_bounds = array<i64: 8, 1536>}, {pipeline_mode = #tpu.pipeline_mode<synchronous>, transform_indices = @transform_1, window_bounds = array<i64: 32, 192>}, {transform_indices = @transform_2, window_bounds = array<i64: 8, 256>}]} {
    %c0_i32 = arith.constant 0 : i32
    %0 = arith.cmpi eq, %arg1, %c0_i32 : i32
    %1 = arith.extui %0 : i1 to i32
    %c0_i32_0 = arith.constant 0 : i32
    %2 = arith.cmpi ne, %1, %c0_i32_0 : i32
    scf.if %2 {
      %cst_132 = arith.constant 0.000000e+00 : f32
      %400 = vector.broadcast %cst_132 : f32 to vector<8x32xf32>
      %c0_133 = arith.constant 0 : index
      %c0_134 = arith.constant 0 : index
      %401 = vector.load %arg5[%c0_133, %c0_134] : memref<8x32xf32, #tpu.memory_space<vmem>>, vector<8x32xf32>
      tpu.vector_store %arg5[%c0_133, %c0_134], %400 {strides = array<i32>} : memref<8x32xf32, #tpu.memory_space<vmem>>, vector<8x32xf32>,
      %cst_135 = arith.constant 0.000000e+00 : f32
      %402 = vector.broadcast %cst_135 : f32 to vector<8x32xf32>
      %c0_136 = arith.constant 0 : index
      %c0_137 = arith.constant 0 : index
      %403 = vector.load %arg6[%c0_136, %c0_137] : memref<8x32xf32, #tpu.memory_space<vmem>>, vector<8x32xf32>
      tpu.vector_store %arg6[%c0_136, %c0_137], %402 {strides = array<i32>} : memref<8x32xf32, #tpu.memory_space<vmem>>, vector<8x32xf32>,
    } else {
    }
    %c0 = arith.constant 0 : index
    %c0_1 = arith.constant 0 : index
    %3 = vector.load %arg5[%c0, %c0_1] : memref<8x32xf32, #tpu.memory_space<vmem>>, vector<8x32xf32>
    %c0_2 = arith.constant 0 : index
    %c0_3 = arith.constant 0 : index
    %4 = vector.load %arg6[%c0_2, %c0_3] : memref<8x32xf32, #tpu.memory_space<vmem>>, vector<8x32xf32>
    %c0_4 = arith.constant 0 : index
    %c0_5 = arith.constant 0 : index
    %5 = vector.load %arg3[%c0_4, %c0_5] : memref<32x192xbf16, #tpu.memory_space<vmem>>, vector<32x192xbf16>
    %6 = arith.truncf %3 : vector<8x32xf32> to vector<8x32xbf16>
    %cst = arith.constant dense<0.000000e+00> : vector<8x192xf32>
    %7 = tpu.matmul %6, %5, %cst {dimension_numbers = #tpu.dot_dimension_numbers<[1], [0], [0], [1], [0, 0, 1, 1], [], []>} : vector<8x32xbf16>, vector<32x192xbf16>, vector<8x192xf32> -> vector<8x192xf32>
    %c0_6 = arith.constant 0 : index
    %c0_7 = arith.constant 0 : index
    %8 = vector.load %arg2[%c0_6, %c0_7] : memref<8x1536xbf16, #tpu.memory_space<vmem>>, vector<8x192xbf16>
    %9 = arith.extf %8 : vector<8x192xbf16> to vector<8x192xf32>
    %10 = arith.addf %7, %9 : vector<8x192xf32>
    %11 = vector.extract_strided_slice %10 {offsets = [0, 0], sizes = [8, 32], strides = [1, 1]} : vector<8x192xf32> to vector<8x32xf32>
    %cst_8 = arith.constant 5.000000e-01 : f32
    %12 = vector.broadcast %cst_8 : f32 to vector<8x32xf32>
    %13 = arith.mulf %12, %11 : vector<8x32xf32>
    %14 = math.tanh %13 : vector<8x32xf32>
    %cst_9 = arith.constant 1.000000e+00 : f32
    %15 = vector.broadcast %cst_9 : f32 to vector<8x32xf32>
    %16 = arith.addf %14, %15 : vector<8x32xf32>
    %cst_10 = arith.constant 5.000000e-01 : f32
    %17 = vector.broadcast %cst_10 : f32 to vector<8x32xf32>
    %18 = arith.mulf %17, %16 : vector<8x32xf32>
    %19 = vector.extract_strided_slice %10 {offsets = [0, 32], sizes = [8, 32], strides = [1, 1]} : vector<8x192xf32> to vector<8x32xf32>
    %cst_11 = arith.constant 5.000000e-01 : f32
    %20 = vector.broadcast %cst_11 : f32 to vector<8x32xf32>
    %21 = arith.mulf %20, %19 : vector<8x32xf32>
    %22 = math.tanh %21 : vector<8x32xf32>
    %cst_12 = arith.constant 1.000000e+00 : f32
    %23 = vector.broadcast %cst_12 : f32 to vector<8x32xf32>
    %24 = arith.addf %22, %23 : vector<8x32xf32>
    %cst_13 = arith.constant 5.000000e-01 : f32
    %25 = vector.broadcast %cst_13 : f32 to vector<8x32xf32>
    %26 = arith.mulf %25, %24 : vector<8x32xf32>
    %27 = vector.extract_strided_slice %10 {offsets = [0, 64], sizes = [8, 32], strides = [1, 1]} : vector<8x192xf32> to vector<8x32xf32>
    %cst_14 = arith.constant 5.000000e-01 : f32
    %28 = vector.broadcast %cst_14 : f32 to vector<8x32xf32>
    %29 = arith.mulf %28, %27 : vector<8x32xf32>
    %30 = math.tanh %29 : vector<8x32xf32>
    %cst_15 = arith.constant 1.000000e+00 : f32
    %31 = vector.broadcast %cst_15 : f32 to vector<8x32xf32>
    %32 = arith.addf %30, %31 : vector<8x32xf32>
    %cst_16 = arith.constant 5.000000e-01 : f32
    %33 = vector.broadcast %cst_16 : f32 to vector<8x32xf32>
    %34 = arith.mulf %33, %32 : vector<8x32xf32>
    %35 = vector.extract_strided_slice %10 {offsets = [0, 96], sizes = [8, 32], strides = [1, 1]} : vector<8x192xf32> to vector<8x32xf32>
    %36 = math.tanh %35 : vector<8x32xf32>
    %37 = vector.extract_strided_slice %10 {offsets = [0, 128], sizes = [8, 32], strides = [1, 1]} : vector<8x192xf32> to vector<8x32xf32>
    %cst_17 = arith.constant 5.000000e-01 : f32
    %38 = vector.broadcast %cst_17 : f32 to vector<8x32xf32>
    %39 = arith.mulf %38, %37 : vector<8x32xf32>
    %40 = math.tanh %39 : vector<8x32xf32>
    %cst_18 = arith.constant 1.000000e+00 : f32
    %41 = vector.broadcast %cst_18 : f32 to vector<8x32xf32>
    %42 = arith.addf %40, %41 : vector<8x32xf32>
    %cst_19 = arith.constant 5.000000e-01 : f32
    %43 = vector.broadcast %cst_19 : f32 to vector<8x32xf32>
    %44 = arith.mulf %43, %42 : vector<8x32xf32>
    %45 = vector.extract_strided_slice %10 {offsets = [0, 160], sizes = [8, 32], strides = [1, 1]} : vector<8x192xf32> to vector<8x32xf32>
    %46 = math.tanh %45 : vector<8x32xf32>
    %47 = arith.mulf %18, %36 : vector<8x32xf32>
    %48 = arith.mulf %44, %46 : vector<8x32xf32>
    %49 = arith.addf %47, %48 : vector<8x32xf32>
    %50 = arith.mulf %34, %4 : vector<8x32xf32>
    %51 = arith.addf %49, %50 : vector<8x32xf32>
    %52 = math.tanh %51 : vector<8x32xf32>
    %53 = arith.mulf %26, %52 : vector<8x32xf32>
    %c0_20 = arith.constant 0 : index
    %c0_21 = arith.constant 0 : index
    %54 = vector.load %arg4[%c0_20, %c0_21] : memref<8x256xf32, #tpu.memory_space<vmem>>, vector<8x32xf32>
    tpu.vector_store %arg4[%c0_20, %c0_21], %53 {strides = array<i32>} : memref<8x256xf32, #tpu.memory_space<vmem>>, vector<8x32xf32>,
    %55 = arith.truncf %53 : vector<8x32xf32> to vector<8x32xbf16>
    %cst_22 = arith.constant dense<0.000000e+00> : vector<8x192xf32>
    %56 = tpu.matmul %55, %5, %cst_22 {dimension_numbers = #tpu.dot_dimension_numbers<[1], [0], [0], [1], [0, 0, 1, 1], [], []>} : vector<8x32xbf16>, vector<32x192xbf16>, vector<8x192xf32> -> vector<8x192xf32>
    %c0_23 = arith.constant 0 : index
    %c192 = arith.constant 192 : index
    %57 = vector.load %arg2[%c0_23, %c192] : memref<8x1536xbf16, #tpu.memory_space<vmem>>, vector<8x192xbf16>
    %58 = arith.extf %57 : vector<8x192xbf16> to vector<8x192xf32>
    %59 = arith.addf %56, %58 : vector<8x192xf32>
    %60 = vector.extract_strided_slice %59 {offsets = [0, 0], sizes = [8, 32], strides = [1, 1]} : vector<8x192xf32> to vector<8x32xf32>
    %cst_24 = arith.constant 5.000000e-01 : f32
    %61 = vector.broadcast %cst_24 : f32 to vector<8x32xf32>
    %62 = arith.mulf %61, %60 : vector<8x32xf32>
    %63 = math.tanh %62 : vector<8x32xf32>
    %cst_25 = arith.constant 1.000000e+00 : f32
    %64 = vector.broadcast %cst_25 : f32 to vector<8x32xf32>
    %65 = arith.addf %63, %64 : vector<8x32xf32>
    %cst_26 = arith.constant 5.000000e-01 : f32
    %66 = vector.broadcast %cst_26 : f32 to vector<8x32xf32>
    %67 = arith.mulf %66, %65 : vector<8x32xf32>
    %68 = vector.extract_strided_slice %59 {offsets = [0, 32], sizes = [8, 32], strides = [1, 1]} : vector<8x192xf32> to vector<8x32xf32>
    %cst_27 = arith.constant 5.000000e-01 : f32
    %69 = vector.broadcast %cst_27 : f32 to vector<8x32xf32>
    %70 = arith.mulf %69, %68 : vector<8x32xf32>
    %71 = math.tanh %70 : vector<8x32xf32>
    %cst_28 = arith.constant 1.000000e+00 : f32
    %72 = vector.broadcast %cst_28 : f32 to vector<8x32xf32>
    %73 = arith.addf %71, %72 : vector<8x32xf32>
    %cst_29 = arith.constant 5.000000e-01 : f32
    %74 = vector.broadcast %cst_29 : f32 to vector<8x32xf32>
    %75 = arith.mulf %74, %73 : vector<8x32xf32>
    %76 = vector.extract_strided_slice %59 {offsets = [0, 64], sizes = [8, 32], strides = [1, 1]} : vector<8x192xf32> to vector<8x32xf32>
    %cst_30 = arith.constant 5.000000e-01 : f32
    %77 = vector.broadcast %cst_30 : f32 to vector<8x32xf32>
    %78 = arith.mulf %77, %76 : vector<8x32xf32>
    %79 = math.tanh %78 : vector<8x32xf32>
    %cst_31 = arith.constant 1.000000e+00 : f32
    %80 = vector.broadcast %cst_31 : f32 to vector<8x32xf32>
    %81 = arith.addf %79, %80 : vector<8x32xf32>
    %cst_32 = arith.constant 5.000000e-01 : f32
    %82 = vector.broadcast %cst_32 : f32 to vector<8x32xf32>
    %83 = arith.mulf %82, %81 : vector<8x32xf32>
    %84 = vector.extract_strided_slice %59 {offsets = [0, 96], sizes = [8, 32], strides = [1, 1]} : vector<8x192xf32> to vector<8x32xf32>
    %85 = math.tanh %84 : vector<8x32xf32>
    %86 = vector.extract_strided_slice %59 {offsets = [0, 128], sizes = [8, 32], strides = [1, 1]} : vector<8x192xf32> to vector<8x32xf32>
    %cst_33 = arith.constant 5.000000e-01 : f32
    %87 = vector.broadcast %cst_33 : f32 to vector<8x32xf32>
    %88 = arith.mulf %87, %86 : vector<8x32xf32>
    %89 = math.tanh %88 : vector<8x32xf32>
    %cst_34 = arith.constant 1.000000e+00 : f32
    %90 = vector.broadcast %cst_34 : f32 to vector<8x32xf32>
    %91 = arith.addf %89, %90 : vector<8x32xf32>
    %cst_35 = arith.constant 5.000000e-01 : f32
    %92 = vector.broadcast %cst_35 : f32 to vector<8x32xf32>
    %93 = arith.mulf %92, %91 : vector<8x32xf32>
    %94 = vector.extract_strided_slice %59 {offsets = [0, 160], sizes = [8, 32], strides = [1, 1]} : vector<8x192xf32> to vector<8x32xf32>
    %95 = math.tanh %94 : vector<8x32xf32>
    %96 = arith.mulf %67, %85 : vector<8x32xf32>
    %97 = arith.mulf %93, %95 : vector<8x32xf32>
    %98 = arith.addf %96, %97 : vector<8x32xf32>
    %99 = arith.mulf %83, %51 : vector<8x32xf32>
    %100 = arith.addf %98, %99 : vector<8x32xf32>
    %101 = math.tanh %100 : vector<8x32xf32>
    %102 = arith.mulf %75, %101 : vector<8x32xf32>
    %c0_36 = arith.constant 0 : index
    %c32 = arith.constant 32 : index
    %103 = vector.load %arg4[%c0_36, %c32] : memref<8x256xf32, #tpu.memory_space<vmem>>, vector<8x32xf32>
    tpu.vector_store %arg4[%c0_36, %c32], %102 {strides = array<i32>} : memref<8x256xf32, #tpu.memory_space<vmem>>, vector<8x32xf32>,
    %104 = arith.truncf %102 : vector<8x32xf32> to vector<8x32xbf16>
    %cst_37 = arith.constant dense<0.000000e+00> : vector<8x192xf32>
    %105 = tpu.matmul %104, %5, %cst_37 {dimension_numbers = #tpu.dot_dimension_numbers<[1], [0], [0], [1], [0, 0, 1, 1], [], []>} : vector<8x32xbf16>, vector<32x192xbf16>, vector<8x192xf32> -> vector<8x192xf32>
    %c0_38 = arith.constant 0 : index
    %c384 = arith.constant 384 : index
    %106 = vector.load %arg2[%c0_38, %c384] : memref<8x1536xbf16, #tpu.memory_space<vmem>>, vector<8x192xbf16>
    %107 = arith.extf %106 : vector<8x192xbf16> to vector<8x192xf32>
    %108 = arith.addf %105, %107 : vector<8x192xf32>
    %109 = vector.extract_strided_slice %108 {offsets = [0, 0], sizes = [8, 32], strides = [1, 1]} : vector<8x192xf32> to vector<8x32xf32>
    %cst_39 = arith.constant 5.000000e-01 : f32
    %110 = vector.broadcast %cst_39 : f32 to vector<8x32xf32>
    %111 = arith.mulf %110, %109 : vector<8x32xf32>
    %112 = math.tanh %111 : vector<8x32xf32>
    %cst_40 = arith.constant 1.000000e+00 : f32
    %113 = vector.broadcast %cst_40 : f32 to vector<8x32xf32>
    %114 = arith.addf %112, %113 : vector<8x32xf32>
    %cst_41 = arith.constant 5.000000e-01 : f32
    %115 = vector.broadcast %cst_41 : f32 to vector<8x32xf32>
    %116 = arith.mulf %115, %114 : vector<8x32xf32>
    %117 = vector.extract_strided_slice %108 {offsets = [0, 32], sizes = [8, 32], strides = [1, 1]} : vector<8x192xf32> to vector<8x32xf32>
    %cst_42 = arith.constant 5.000000e-01 : f32
    %118 = vector.broadcast %cst_42 : f32 to vector<8x32xf32>
    %119 = arith.mulf %118, %117 : vector<8x32xf32>
    %120 = math.tanh %119 : vector<8x32xf32>
    %cst_43 = arith.constant 1.000000e+00 : f32
    %121 = vector.broadcast %cst_43 : f32 to vector<8x32xf32>
    %122 = arith.addf %120, %121 : vector<8x32xf32>
    %cst_44 = arith.constant 5.000000e-01 : f32
    %123 = vector.broadcast %cst_44 : f32 to vector<8x32xf32>
    %124 = arith.mulf %123, %122 : vector<8x32xf32>
    %125 = vector.extract_strided_slice %108 {offsets = [0, 64], sizes = [8, 32], strides = [1, 1]} : vector<8x192xf32> to vector<8x32xf32>
    %cst_45 = arith.constant 5.000000e-01 : f32
    %126 = vector.broadcast %cst_45 : f32 to vector<8x32xf32>
    %127 = arith.mulf %126, %125 : vector<8x32xf32>
    %128 = math.tanh %127 : vector<8x32xf32>
    %cst_46 = arith.constant 1.000000e+00 : f32
    %129 = vector.broadcast %cst_46 : f32 to vector<8x32xf32>
    %130 = arith.addf %128, %129 : vector<8x32xf32>
    %cst_47 = arith.constant 5.000000e-01 : f32
    %131 = vector.broadcast %cst_47 : f32 to vector<8x32xf32>
    %132 = arith.mulf %131, %130 : vector<8x32xf32>
    %133 = vector.extract_strided_slice %108 {offsets = [0, 96], sizes = [8, 32], strides = [1, 1]} : vector<8x192xf32> to vector<8x32xf32>
    %134 = math.tanh %133 : vector<8x32xf32>
    %135 = vector.extract_strided_slice %108 {offsets = [0, 128], sizes = [8, 32], strides = [1, 1]} : vector<8x192xf32> to vector<8x32xf32>
    %cst_48 = arith.constant 5.000000e-01 : f32
    %136 = vector.broadcast %cst_48 : f32 to vector<8x32xf32>
    %137 = arith.mulf %136, %135 : vector<8x32xf32>
    %138 = math.tanh %137 : vector<8x32xf32>
    %cst_49 = arith.constant 1.000000e+00 : f32
    %139 = vector.broadcast %cst_49 : f32 to vector<8x32xf32>
    %140 = arith.addf %138, %139 : vector<8x32xf32>
    %cst_50 = arith.constant 5.000000e-01 : f32
    %141 = vector.broadcast %cst_50 : f32 to vector<8x32xf32>
    %142 = arith.mulf %141, %140 : vector<8x32xf32>
    %143 = vector.extract_strided_slice %108 {offsets = [0, 160], sizes = [8, 32], strides = [1, 1]} : vector<8x192xf32> to vector<8x32xf32>
    %144 = math.tanh %143 : vector<8x32xf32>
    %145 = arith.mulf %116, %134 : vector<8x32xf32>
    %146 = arith.mulf %142, %144 : vector<8x32xf32>
    %147 = arith.addf %145, %146 : vector<8x32xf32>
    %148 = arith.mulf %132, %100 : vector<8x32xf32>
    %149 = arith.addf %147, %148 : vector<8x32xf32>
    %150 = math.tanh %149 : vector<8x32xf32>
    %151 = arith.mulf %124, %150 : vector<8x32xf32>
    %c0_51 = arith.constant 0 : index
    %c64 = arith.constant 64 : index
    %152 = vector.load %arg4[%c0_51, %c64] : memref<8x256xf32, #tpu.memory_space<vmem>>, vector<8x32xf32>
    tpu.vector_store %arg4[%c0_51, %c64], %151 {strides = array<i32>} : memref<8x256xf32, #tpu.memory_space<vmem>>, vector<8x32xf32>,
    %153 = arith.truncf %151 : vector<8x32xf32> to vector<8x32xbf16>
    %cst_52 = arith.constant dense<0.000000e+00> : vector<8x192xf32>
    %154 = tpu.matmul %153, %5, %cst_52 {dimension_numbers = #tpu.dot_dimension_numbers<[1], [0], [0], [1], [0, 0, 1, 1], [], []>} : vector<8x32xbf16>, vector<32x192xbf16>, vector<8x192xf32> -> vector<8x192xf32>
    %c0_53 = arith.constant 0 : index
    %c576 = arith.constant 576 : index
    %155 = vector.load %arg2[%c0_53, %c576] : memref<8x1536xbf16, #tpu.memory_space<vmem>>, vector<8x192xbf16>
    %156 = arith.extf %155 : vector<8x192xbf16> to vector<8x192xf32>
    %157 = arith.addf %154, %156 : vector<8x192xf32>
    %158 = vector.extract_strided_slice %157 {offsets = [0, 0], sizes = [8, 32], strides = [1, 1]} : vector<8x192xf32> to vector<8x32xf32>
    %cst_54 = arith.constant 5.000000e-01 : f32
    %159 = vector.broadcast %cst_54 : f32 to vector<8x32xf32>
    %160 = arith.mulf %159, %158 : vector<8x32xf32>
    %161 = math.tanh %160 : vector<8x32xf32>
    %cst_55 = arith.constant 1.000000e+00 : f32
    %162 = vector.broadcast %cst_55 : f32 to vector<8x32xf32>
    %163 = arith.addf %161, %162 : vector<8x32xf32>
    %cst_56 = arith.constant 5.000000e-01 : f32
    %164 = vector.broadcast %cst_56 : f32 to vector<8x32xf32>
    %165 = arith.mulf %164, %163 : vector<8x32xf32>
    %166 = vector.extract_strided_slice %157 {offsets = [0, 32], sizes = [8, 32], strides = [1, 1]} : vector<8x192xf32> to vector<8x32xf32>
    %cst_57 = arith.constant 5.000000e-01 : f32
    %167 = vector.broadcast %cst_57 : f32 to vector<8x32xf32>
    %168 = arith.mulf %167, %166 : vector<8x32xf32>
    %169 = math.tanh %168 : vector<8x32xf32>
    %cst_58 = arith.constant 1.000000e+00 : f32
    %170 = vector.broadcast %cst_58 : f32 to vector<8x32xf32>
    %171 = arith.addf %169, %170 : vector<8x32xf32>
    %cst_59 = arith.constant 5.000000e-01 : f32
    %172 = vector.broadcast %cst_59 : f32 to vector<8x32xf32>
    %173 = arith.mulf %172, %171 : vector<8x32xf32>
    %174 = vector.extract_strided_slice %157 {offsets = [0, 64], sizes = [8, 32], strides = [1, 1]} : vector<8x192xf32> to vector<8x32xf32>
    %cst_60 = arith.constant 5.000000e-01 : f32
    %175 = vector.broadcast %cst_60 : f32 to vector<8x32xf32>
    %176 = arith.mulf %175, %174 : vector<8x32xf32>
    %177 = math.tanh %176 : vector<8x32xf32>
    %cst_61 = arith.constant 1.000000e+00 : f32
    %178 = vector.broadcast %cst_61 : f32 to vector<8x32xf32>
    %179 = arith.addf %177, %178 : vector<8x32xf32>
    %cst_62 = arith.constant 5.000000e-01 : f32
    %180 = vector.broadcast %cst_62 : f32 to vector<8x32xf32>
    %181 = arith.mulf %180, %179 : vector<8x32xf32>
    %182 = vector.extract_strided_slice %157 {offsets = [0, 96], sizes = [8, 32], strides = [1, 1]} : vector<8x192xf32> to vector<8x32xf32>
    %183 = math.tanh %182 : vector<8x32xf32>
    %184 = vector.extract_strided_slice %157 {offsets = [0, 128], sizes = [8, 32], strides = [1, 1]} : vector<8x192xf32> to vector<8x32xf32>
    %cst_63 = arith.constant 5.000000e-01 : f32
    %185 = vector.broadcast %cst_63 : f32 to vector<8x32xf32>
    %186 = arith.mulf %185, %184 : vector<8x32xf32>
    %187 = math.tanh %186 : vector<8x32xf32>
    %cst_64 = arith.constant 1.000000e+00 : f32
    %188 = vector.broadcast %cst_64 : f32 to vector<8x32xf32>
    %189 = arith.addf %187, %188 : vector<8x32xf32>
    %cst_65 = arith.constant 5.000000e-01 : f32
    %190 = vector.broadcast %cst_65 : f32 to vector<8x32xf32>
    %191 = arith.mulf %190, %189 : vector<8x32xf32>
    %192 = vector.extract_strided_slice %157 {offsets = [0, 160], sizes = [8, 32], strides = [1, 1]} : vector<8x192xf32> to vector<8x32xf32>
    %193 = math.tanh %192 : vector<8x32xf32>
    %194 = arith.mulf %165, %183 : vector<8x32xf32>
    %195 = arith.mulf %191, %193 : vector<8x32xf32>
    %196 = arith.addf %194, %195 : vector<8x32xf32>
    %197 = arith.mulf %181, %149 : vector<8x32xf32>
    %198 = arith.addf %196, %197 : vector<8x32xf32>
    %199 = math.tanh %198 : vector<8x32xf32>
    %200 = arith.mulf %173, %199 : vector<8x32xf32>
    %c0_66 = arith.constant 0 : index
    %c96 = arith.constant 96 : index
    %201 = vector.load %arg4[%c0_66, %c96] : memref<8x256xf32, #tpu.memory_space<vmem>>, vector<8x32xf32>
    tpu.vector_store %arg4[%c0_66, %c96], %200 {strides = array<i32>} : memref<8x256xf32, #tpu.memory_space<vmem>>, vector<8x32xf32>,
    %202 = arith.truncf %200 : vector<8x32xf32> to vector<8x32xbf16>
    %cst_67 = arith.constant dense<0.000000e+00> : vector<8x192xf32>
    %203 = tpu.matmul %202, %5, %cst_67 {dimension_numbers = #tpu.dot_dimension_numbers<[1], [0], [0], [1], [0, 0, 1, 1], [], []>} : vector<8x32xbf16>, vector<32x192xbf16>, vector<8x192xf32> -> vector<8x192xf32>
    %c0_68 = arith.constant 0 : index
    %c768 = arith.constant 768 : index
    %204 = vector.load %arg2[%c0_68, %c768] : memref<8x1536xbf16, #tpu.memory_space<vmem>>, vector<8x192xbf16>
    %205 = arith.extf %204 : vector<8x192xbf16> to vector<8x192xf32>
    %206 = arith.addf %203, %205 : vector<8x192xf32>
    %207 = vector.extract_strided_slice %206 {offsets = [0, 0], sizes = [8, 32], strides = [1, 1]} : vector<8x192xf32> to vector<8x32xf32>
    %cst_69 = arith.constant 5.000000e-01 : f32
    %208 = vector.broadcast %cst_69 : f32 to vector<8x32xf32>
    %209 = arith.mulf %208, %207 : vector<8x32xf32>
    %210 = math.tanh %209 : vector<8x32xf32>
    %cst_70 = arith.constant 1.000000e+00 : f32
    %211 = vector.broadcast %cst_70 : f32 to vector<8x32xf32>
    %212 = arith.addf %210, %211 : vector<8x32xf32>
    %cst_71 = arith.constant 5.000000e-01 : f32
    %213 = vector.broadcast %cst_71 : f32 to vector<8x32xf32>
    %214 = arith.mulf %213, %212 : vector<8x32xf32>
    %215 = vector.extract_strided_slice %206 {offsets = [0, 32], sizes = [8, 32], strides = [1, 1]} : vector<8x192xf32> to vector<8x32xf32>
    %cst_72 = arith.constant 5.000000e-01 : f32
    %216 = vector.broadcast %cst_72 : f32 to vector<8x32xf32>
    %217 = arith.mulf %216, %215 : vector<8x32xf32>
    %218 = math.tanh %217 : vector<8x32xf32>
    %cst_73 = arith.constant 1.000000e+00 : f32
    %219 = vector.broadcast %cst_73 : f32 to vector<8x32xf32>
    %220 = arith.addf %218, %219 : vector<8x32xf32>
    %cst_74 = arith.constant 5.000000e-01 : f32
    %221 = vector.broadcast %cst_74 : f32 to vector<8x32xf32>
    %222 = arith.mulf %221, %220 : vector<8x32xf32>
    %223 = vector.extract_strided_slice %206 {offsets = [0, 64], sizes = [8, 32], strides = [1, 1]} : vector<8x192xf32> to vector<8x32xf32>
    %cst_75 = arith.constant 5.000000e-01 : f32
    %224 = vector.broadcast %cst_75 : f32 to vector<8x32xf32>
    %225 = arith.mulf %224, %223 : vector<8x32xf32>
    %226 = math.tanh %225 : vector<8x32xf32>
    %cst_76 = arith.constant 1.000000e+00 : f32
    %227 = vector.broadcast %cst_76 : f32 to vector<8x32xf32>
    %228 = arith.addf %226, %227 : vector<8x32xf32>
    %cst_77 = arith.constant 5.000000e-01 : f32
    %229 = vector.broadcast %cst_77 : f32 to vector<8x32xf32>
    %230 = arith.mulf %229, %228 : vector<8x32xf32>
    %231 = vector.extract_strided_slice %206 {offsets = [0, 96], sizes = [8, 32], strides = [1, 1]} : vector<8x192xf32> to vector<8x32xf32>
    %232 = math.tanh %231 : vector<8x32xf32>
    %233 = vector.extract_strided_slice %206 {offsets = [0, 128], sizes = [8, 32], strides = [1, 1]} : vector<8x192xf32> to vector<8x32xf32>
    %cst_78 = arith.constant 5.000000e-01 : f32
    %234 = vector.broadcast %cst_78 : f32 to vector<8x32xf32>
    %235 = arith.mulf %234, %233 : vector<8x32xf32>
    %236 = math.tanh %235 : vector<8x32xf32>
    %cst_79 = arith.constant 1.000000e+00 : f32
    %237 = vector.broadcast %cst_79 : f32 to vector<8x32xf32>
    %238 = arith.addf %236, %237 : vector<8x32xf32>
    %cst_80 = arith.constant 5.000000e-01 : f32
    %239 = vector.broadcast %cst_80 : f32 to vector<8x32xf32>
    %240 = arith.mulf %239, %238 : vector<8x32xf32>
    %241 = vector.extract_strided_slice %206 {offsets = [0, 160], sizes = [8, 32], strides = [1, 1]} : vector<8x192xf32> to vector<8x32xf32>
    %242 = math.tanh %241 : vector<8x32xf32>
    %243 = arith.mulf %214, %232 : vector<8x32xf32>
    %244 = arith.mulf %240, %242 : vector<8x32xf32>
    %245 = arith.addf %243, %244 : vector<8x32xf32>
    %246 = arith.mulf %230, %198 : vector<8x32xf32>
    %247 = arith.addf %245, %246 : vector<8x32xf32>
    %248 = math.tanh %247 : vector<8x32xf32>
    %249 = arith.mulf %222, %248 : vector<8x32xf32>
    %c0_81 = arith.constant 0 : index
    %c128 = arith.constant 128 : index
    %250 = vector.load %arg4[%c0_81, %c128] : memref<8x256xf32, #tpu.memory_space<vmem>>, vector<8x32xf32>
    tpu.vector_store %arg4[%c0_81, %c128], %249 {strides = array<i32>} : memref<8x256xf32, #tpu.memory_space<vmem>>, vector<8x32xf32>,
    %251 = arith.truncf %249 : vector<8x32xf32> to vector<8x32xbf16>
    %cst_82 = arith.constant dense<0.000000e+00> : vector<8x192xf32>
    %252 = tpu.matmul %251, %5, %cst_82 {dimension_numbers = #tpu.dot_dimension_numbers<[1], [0], [0], [1], [0, 0, 1, 1], [], []>} : vector<8x32xbf16>, vector<32x192xbf16>, vector<8x192xf32> -> vector<8x192xf32>
    %c0_83 = arith.constant 0 : index
    %c960 = arith.constant 960 : index
    %253 = vector.load %arg2[%c0_83, %c960] : memref<8x1536xbf16, #tpu.memory_space<vmem>>, vector<8x192xbf16>
    %254 = arith.extf %253 : vector<8x192xbf16> to vector<8x192xf32>
    %255 = arith.addf %252, %254 : vector<8x192xf32>
    %256 = vector.extract_strided_slice %255 {offsets = [0, 0], sizes = [8, 32], strides = [1, 1]} : vector<8x192xf32> to vector<8x32xf32>
    %cst_84 = arith.constant 5.000000e-01 : f32
    %257 = vector.broadcast %cst_84 : f32 to vector<8x32xf32>
    %258 = arith.mulf %257, %256 : vector<8x32xf32>
    %259 = math.tanh %258 : vector<8x32xf32>
    %cst_85 = arith.constant 1.000000e+00 : f32
    %260 = vector.broadcast %cst_85 : f32 to vector<8x32xf32>
    %261 = arith.addf %259, %260 : vector<8x32xf32>
    %cst_86 = arith.constant 5.000000e-01 : f32
    %262 = vector.broadcast %cst_86 : f32 to vector<8x32xf32>
    %263 = arith.mulf %262, %261 : vector<8x32xf32>
    %264 = vector.extract_strided_slice %255 {offsets = [0, 32], sizes = [8, 32], strides = [1, 1]} : vector<8x192xf32> to vector<8x32xf32>
    %cst_87 = arith.constant 5.000000e-01 : f32
    %265 = vector.broadcast %cst_87 : f32 to vector<8x32xf32>
    %266 = arith.mulf %265, %264 : vector<8x32xf32>
    %267 = math.tanh %266 : vector<8x32xf32>
    %cst_88 = arith.constant 1.000000e+00 : f32
    %268 = vector.broadcast %cst_88 : f32 to vector<8x32xf32>
    %269 = arith.addf %267, %268 : vector<8x32xf32>
    %cst_89 = arith.constant 5.000000e-01 : f32
    %270 = vector.broadcast %cst_89 : f32 to vector<8x32xf32>
    %271 = arith.mulf %270, %269 : vector<8x32xf32>
    %272 = vector.extract_strided_slice %255 {offsets = [0, 64], sizes = [8, 32], strides = [1, 1]} : vector<8x192xf32> to vector<8x32xf32>
    %cst_90 = arith.constant 5.000000e-01 : f32
    %273 = vector.broadcast %cst_90 : f32 to vector<8x32xf32>
    %274 = arith.mulf %273, %272 : vector<8x32xf32>
    %275 = math.tanh %274 : vector<8x32xf32>
    %cst_91 = arith.constant 1.000000e+00 : f32
    %276 = vector.broadcast %cst_91 : f32 to vector<8x32xf32>
    %277 = arith.addf %275, %276 : vector<8x32xf32>
    %cst_92 = arith.constant 5.000000e-01 : f32
    %278 = vector.broadcast %cst_92 : f32 to vector<8x32xf32>
    %279 = arith.mulf %278, %277 : vector<8x32xf32>
    %280 = vector.extract_strided_slice %255 {offsets = [0, 96], sizes = [8, 32], strides = [1, 1]} : vector<8x192xf32> to vector<8x32xf32>
    %281 = math.tanh %280 : vector<8x32xf32>
    %282 = vector.extract_strided_slice %255 {offsets = [0, 128], sizes = [8, 32], strides = [1, 1]} : vector<8x192xf32> to vector<8x32xf32>
    %cst_93 = arith.constant 5.000000e-01 : f32
    %283 = vector.broadcast %cst_93 : f32 to vector<8x32xf32>
    %284 = arith.mulf %283, %282 : vector<8x32xf32>
    %285 = math.tanh %284 : vector<8x32xf32>
    %cst_94 = arith.constant 1.000000e+00 : f32
    %286 = vector.broadcast %cst_94 : f32 to vector<8x32xf32>
    %287 = arith.addf %285, %286 : vector<8x32xf32>
    %cst_95 = arith.constant 5.000000e-01 : f32
    %288 = vector.broadcast %cst_95 : f32 to vector<8x32xf32>
    %289 = arith.mulf %288, %287 : vector<8x32xf32>
    %290 = vector.extract_strided_slice %255 {offsets = [0, 160], sizes = [8, 32], strides = [1, 1]} : vector<8x192xf32> to vector<8x32xf32>
    %291 = math.tanh %290 : vector<8x32xf32>
    %292 = arith.mulf %263, %281 : vector<8x32xf32>
    %293 = arith.mulf %289, %291 : vector<8x32xf32>
    %294 = arith.addf %292, %293 : vector<8x32xf32>
    %295 = arith.mulf %279, %247 : vector<8x32xf32>
    %296 = arith.addf %294, %295 : vector<8x32xf32>
    %297 = math.tanh %296 : vector<8x32xf32>
    %298 = arith.mulf %271, %297 : vector<8x32xf32>
    %c0_96 = arith.constant 0 : index
    %c160 = arith.constant 160 : index
    %299 = vector.load %arg4[%c0_96, %c160] : memref<8x256xf32, #tpu.memory_space<vmem>>, vector<8x32xf32>
    tpu.vector_store %arg4[%c0_96, %c160], %298 {strides = array<i32>} : memref<8x256xf32, #tpu.memory_space<vmem>>, vector<8x32xf32>,
    %300 = arith.truncf %298 : vector<8x32xf32> to vector<8x32xbf16>
    %cst_97 = arith.constant dense<0.000000e+00> : vector<8x192xf32>
    %301 = tpu.matmul %300, %5, %cst_97 {dimension_numbers = #tpu.dot_dimension_numbers<[1], [0], [0], [1], [0, 0, 1, 1], [], []>} : vector<8x32xbf16>, vector<32x192xbf16>, vector<8x192xf32> -> vector<8x192xf32>
    %c0_98 = arith.constant 0 : index
    %c1152 = arith.constant 1152 : index
    %302 = vector.load %arg2[%c0_98, %c1152] : memref<8x1536xbf16, #tpu.memory_space<vmem>>, vector<8x192xbf16>
    %303 = arith.extf %302 : vector<8x192xbf16> to vector<8x192xf32>
    %304 = arith.addf %301, %303 : vector<8x192xf32>
    %305 = vector.extract_strided_slice %304 {offsets = [0, 0], sizes = [8, 32], strides = [1, 1]} : vector<8x192xf32> to vector<8x32xf32>
    %cst_99 = arith.constant 5.000000e-01 : f32
    %306 = vector.broadcast %cst_99 : f32 to vector<8x32xf32>
    %307 = arith.mulf %306, %305 : vector<8x32xf32>
    %308 = math.tanh %307 : vector<8x32xf32>
    %cst_100 = arith.constant 1.000000e+00 : f32
    %309 = vector.broadcast %cst_100 : f32 to vector<8x32xf32>
    %310 = arith.addf %308, %309 : vector<8x32xf32>
    %cst_101 = arith.constant 5.000000e-01 : f32
    %311 = vector.broadcast %cst_101 : f32 to vector<8x32xf32>
    %312 = arith.mulf %311, %310 : vector<8x32xf32>
    %313 = vector.extract_strided_slice %304 {offsets = [0, 32], sizes = [8, 32], strides = [1, 1]} : vector<8x192xf32> to vector<8x32xf32>
    %cst_102 = arith.constant 5.000000e-01 : f32
    %314 = vector.broadcast %cst_102 : f32 to vector<8x32xf32>
    %315 = arith.mulf %314, %313 : vector<8x32xf32>
    %316 = math.tanh %315 : vector<8x32xf32>
    %cst_103 = arith.constant 1.000000e+00 : f32
    %317 = vector.broadcast %cst_103 : f32 to vector<8x32xf32>
    %318 = arith.addf %316, %317 : vector<8x32xf32>
    %cst_104 = arith.constant 5.000000e-01 : f32
    %319 = vector.broadcast %cst_104 : f32 to vector<8x32xf32>
    %320 = arith.mulf %319, %318 : vector<8x32xf32>
    %321 = vector.extract_strided_slice %304 {offsets = [0, 64], sizes = [8, 32], strides = [1, 1]} : vector<8x192xf32> to vector<8x32xf32>
    %cst_105 = arith.constant 5.000000e-01 : f32
    %322 = vector.broadcast %cst_105 : f32 to vector<8x32xf32>
    %323 = arith.mulf %322, %321 : vector<8x32xf32>
    %324 = math.tanh %323 : vector<8x32xf32>
    %cst_106 = arith.constant 1.000000e+00 : f32
    %325 = vector.broadcast %cst_106 : f32 to vector<8x32xf32>
    %326 = arith.addf %324, %325 : vector<8x32xf32>
    %cst_107 = arith.constant 5.000000e-01 : f32
    %327 = vector.broadcast %cst_107 : f32 to vector<8x32xf32>
    %328 = arith.mulf %327, %326 : vector<8x32xf32>
    %329 = vector.extract_strided_slice %304 {offsets = [0, 96], sizes = [8, 32], strides = [1, 1]} : vector<8x192xf32> to vector<8x32xf32>
    %330 = math.tanh %329 : vector<8x32xf32>
    %331 = vector.extract_strided_slice %304 {offsets = [0, 128], sizes = [8, 32], strides = [1, 1]} : vector<8x192xf32> to vector<8x32xf32>
    %cst_108 = arith.constant 5.000000e-01 : f32
    %332 = vector.broadcast %cst_108 : f32 to vector<8x32xf32>
    %333 = arith.mulf %332, %331 : vector<8x32xf32>
    %334 = math.tanh %333 : vector<8x32xf32>
    %cst_109 = arith.constant 1.000000e+00 : f32
    %335 = vector.broadcast %cst_109 : f32 to vector<8x32xf32>
    %336 = arith.addf %334, %335 : vector<8x32xf32>
    %cst_110 = arith.constant 5.000000e-01 : f32
    %337 = vector.broadcast %cst_110 : f32 to vector<8x32xf32>
    %338 = arith.mulf %337, %336 : vector<8x32xf32>
    %339 = vector.extract_strided_slice %304 {offsets = [0, 160], sizes = [8, 32], strides = [1, 1]} : vector<8x192xf32> to vector<8x32xf32>
    %340 = math.tanh %339 : vector<8x32xf32>
    %341 = arith.mulf %312, %330 : vector<8x32xf32>
    %342 = arith.mulf %338, %340 : vector<8x32xf32>
    %343 = arith.addf %341, %342 : vector<8x32xf32>
    %344 = arith.mulf %328, %296 : vector<8x32xf32>
    %345 = arith.addf %343, %344 : vector<8x32xf32>
    %346 = math.tanh %345 : vector<8x32xf32>
    %347 = arith.mulf %320, %346 : vector<8x32xf32>
    %c0_111 = arith.constant 0 : index
    %c192_112 = arith.constant 192 : index
    %348 = vector.load %arg4[%c0_111, %c192_112] : memref<8x256xf32, #tpu.memory_space<vmem>>, vector<8x32xf32>
    tpu.vector_store %arg4[%c0_111, %c192_112], %347 {strides = array<i32>} : memref<8x256xf32, #tpu.memory_space<vmem>>, vector<8x32xf32>,
    %349 = arith.truncf %347 : vector<8x32xf32> to vector<8x32xbf16>
    %cst_113 = arith.constant dense<0.000000e+00> : vector<8x192xf32>
    %350 = tpu.matmul %349, %5, %cst_113 {dimension_numbers = #tpu.dot_dimension_numbers<[1], [0], [0], [1], [0, 0, 1, 1], [], []>} : vector<8x32xbf16>, vector<32x192xbf16>, vector<8x192xf32> -> vector<8x192xf32>
    %c0_114 = arith.constant 0 : index
    %c1344 = arith.constant 1344 : index
    %351 = vector.load %arg2[%c0_114, %c1344] : memref<8x1536xbf16, #tpu.memory_space<vmem>>, vector<8x192xbf16>
    %352 = arith.extf %351 : vector<8x192xbf16> to vector<8x192xf32>
    %353 = arith.addf %350, %352 : vector<8x192xf32>
    %354 = vector.extract_strided_slice %353 {offsets = [0, 0], sizes = [8, 32], strides = [1, 1]} : vector<8x192xf32> to vector<8x32xf32>
    %cst_115 = arith.constant 5.000000e-01 : f32
    %355 = vector.broadcast %cst_115 : f32 to vector<8x32xf32>
    %356 = arith.mulf %355, %354 : vector<8x32xf32>
    %357 = math.tanh %356 : vector<8x32xf32>
    %cst_116 = arith.constant 1.000000e+00 : f32
    %358 = vector.broadcast %cst_116 : f32 to vector<8x32xf32>
    %359 = arith.addf %357, %358 : vector<8x32xf32>
    %cst_117 = arith.constant 5.000000e-01 : f32
    %360 = vector.broadcast %cst_117 : f32 to vector<8x32xf32>
    %361 = arith.mulf %360, %359 : vector<8x32xf32>
    %362 = vector.extract_strided_slice %353 {offsets = [0, 32], sizes = [8, 32], strides = [1, 1]} : vector<8x192xf32> to vector<8x32xf32>
    %cst_118 = arith.constant 5.000000e-01 : f32
    %363 = vector.broadcast %cst_118 : f32 to vector<8x32xf32>
    %364 = arith.mulf %363, %362 : vector<8x32xf32>
    %365 = math.tanh %364 : vector<8x32xf32>
    %cst_119 = arith.constant 1.000000e+00 : f32
    %366 = vector.broadcast %cst_119 : f32 to vector<8x32xf32>
    %367 = arith.addf %365, %366 : vector<8x32xf32>
    %cst_120 = arith.constant 5.000000e-01 : f32
    %368 = vector.broadcast %cst_120 : f32 to vector<8x32xf32>
    %369 = arith.mulf %368, %367 : vector<8x32xf32>
    %370 = vector.extract_strided_slice %353 {offsets = [0, 64], sizes = [8, 32], strides = [1, 1]} : vector<8x192xf32> to vector<8x32xf32>
    %cst_121 = arith.constant 5.000000e-01 : f32
    %371 = vector.broadcast %cst_121 : f32 to vector<8x32xf32>
    %372 = arith.mulf %371, %370 : vector<8x32xf32>
    %373 = math.tanh %372 : vector<8x32xf32>
    %cst_122 = arith.constant 1.000000e+00 : f32
    %374 = vector.broadcast %cst_122 : f32 to vector<8x32xf32>
    %375 = arith.addf %373, %374 : vector<8x32xf32>
    %cst_123 = arith.constant 5.000000e-01 : f32
    %376 = vector.broadcast %cst_123 : f32 to vector<8x32xf32>
    %377 = arith.mulf %376, %375 : vector<8x32xf32>
    %378 = vector.extract_strided_slice %353 {offsets = [0, 96], sizes = [8, 32], strides = [1, 1]} : vector<8x192xf32> to vector<8x32xf32>
    %379 = math.tanh %378 : vector<8x32xf32>
    %380 = vector.extract_strided_slice %353 {offsets = [0, 128], sizes = [8, 32], strides = [1, 1]} : vector<8x192xf32> to vector<8x32xf32>
    %cst_124 = arith.constant 5.000000e-01 : f32
    %381 = vector.broadcast %cst_124 : f32 to vector<8x32xf32>
    %382 = arith.mulf %381, %380 : vector<8x32xf32>
    %383 = math.tanh %382 : vector<8x32xf32>
    %cst_125 = arith.constant 1.000000e+00 : f32
    %384 = vector.broadcast %cst_125 : f32 to vector<8x32xf32>
    %385 = arith.addf %383, %384 : vector<8x32xf32>
    %cst_126 = arith.constant 5.000000e-01 : f32
    %386 = vector.broadcast %cst_126 : f32 to vector<8x32xf32>
    %387 = arith.mulf %386, %385 : vector<8x32xf32>
    %388 = vector.extract_strided_slice %353 {offsets = [0, 160], sizes = [8, 32], strides = [1, 1]} : vector<8x192xf32> to vector<8x32xf32>
    %389 = math.tanh %388 : vector<8x32xf32>
    %390 = arith.mulf %361, %379 : vector<8x32xf32>
    %391 = arith.mulf %387, %389 : vector<8x32xf32>
    %392 = arith.addf %390, %391 : vector<8x32xf32>
    %393 = arith.mulf %377, %345 : vector<8x32xf32>
    %394 = arith.addf %392, %393 : vector<8x32xf32>
    %395 = math.tanh %394 : vector<8x32xf32>
    %396 = arith.mulf %369, %395 : vector<8x32xf32>
    %c0_127 = arith.constant 0 : index
    %c224 = arith.constant 224 : index
    %397 = vector.load %arg4[%c0_127, %c224] : memref<8x256xf32, #tpu.memory_space<vmem>>, vector<8x32xf32>
    tpu.vector_store %arg4[%c0_127, %c224], %396 {strides = array<i32>} : memref<8x256xf32, #tpu.memory_space<vmem>>, vector<8x32xf32>,
    %c0_128 = arith.constant 0 : index
    %c0_129 = arith.constant 0 : index
    %398 = vector.load %arg5[%c0_128, %c0_129] : memref<8x32xf32, #tpu.memory_space<vmem>>, vector<8x32xf32>
    tpu.vector_store %arg5[%c0_128, %c0_129], %396 {strides = array<i32>} : memref<8x32xf32, #tpu.memory_space<vmem>>, vector<8x32xf32>,
    %c0_130 = arith.constant 0 : index
    %c0_131 = arith.constant 0 : index
    %399 = vector.load %arg6[%c0_130, %c0_131] : memref<8x32xf32, #tpu.memory_space<vmem>>, vector<8x32xf32>
    tpu.vector_store %arg6[%c0_130, %c0_131], %394 {strides = array<i32>} : memref<8x32xf32, #tpu.memory_space<vmem>>, vector<8x32xf32>,
    return
  }
  func.func @transform_0(%arg0: i32, %arg1: i32) -> (i32, i32) {
    %c0_i32 = arith.constant 0 : i32
    return %arg0, %arg1 : i32, i32
  }
  func.func @transform_1(%arg0: i32, %arg1: i32) -> (i32, i32) {
    %c0_i32 = arith.constant 0 : i32
    %c0_i32_0 = arith.constant 0 : i32
    %c0_i32_1 = arith.constant 0 : i32
    return %c0_i32, %c0_i32_0 : i32, i32
  }
  func.func @transform_2(%arg0: i32, %arg1: i32) -> (i32, i32) {
    %c0_i32 = arith.constant 0 : i32
    return %arg0, %arg1 : i32, i32
  }
}

</mosaic_0001>

<llo_original>
// kernel: my_lstm_forward.1
$region0: #{my_lstm_forward.1}
  #allocation0 [shape = 'u32[]', space=smem, size = 0x4, offset = 0x4, fixed_abs, tag = 'smem constant byte address 0x4 - core index']
  #allocation1 [shape = 'u32[72,128]{1,0:T(1,128)}', space=vmem, size = 0x9000, scoped, tag = 'internal scratch']
  #allocation2 [shape = 'f32[8,32]{1,0:T(8,128)}', space=vmem, size = 0x1000, scoped, tag = 'scratch operand']
  #allocation3 [shape = 'f32[8,32]{1,0:T(8,128)}', space=vmem, size = 0x1000, scoped, tag = 'scratch operand']
  %s0 = inlined_call_operand.vmem [shape: bf16[8,3072], index: 0, kind: input, shape index: {}]
  %s1 = inlined_call_operand.vmem [shape: bf16[32,192], index: 1, kind: input, shape index: {}]
  %s2 = inlined_call_operand.vmem [shape: f32[8,512], index: 2, kind: output, shape index: {}]
  %s3 = sld [smem:[#allocation0]]
  $region45: #{my_lstm_forward.1} parent=0
    _
  %s5 = ssub.s32 1, %s3
  %s6 = scalar_select 0, %s5, %s3
  loop: start=0, step=1, limit=4
  $region2: #{my_lstm_forward.1} parent=0 // loop_pre_header
    _
  $region3: #{my_lstm_forward.1} parent=0 // loop_header
    %s8 = sphi 0, %s12
    %p9 = scmp.ge.s32.totalorder %s8, 4
    %s15 = sphi 0, %s27
    %s16 = sphi 0, %s23
    %s17 = sphi 0, %s15
    %s18 = sphi 0, %s16
    %s19 = sphi 0, %s17
    %s20 = sphi 0, %s18
    %s32 = sphi 0, %s34
    %s35 = sphi 0, %s32
    %s36 = sphi 0, %s35
    %s52 = sphi 0, %s36
    %s56 = sphi 0, %s56
    %s58 = sphi 0, %s56
    %s59 = sphi 0, %s58
    %s73 = sphi 0, %s59
    %s81 = sphi 0, %s83
    %s84 = sphi 0, %s81
    %s85 = sphi 0, %s84
    %s101 = sphi 0, %s85
  $region4: #{my_lstm_forward.1} parent=0 // loop_header_branch
    %11 = sbr.rel (%p9) target = $region8
  $region5: #{my_lstm_forward.1} parent=0 // loop_body
    %s13 = ssub.s32 %s8, 1
    %s14 = ssub.s32 %s8, 2
    %s21 = sadd.s32 1, %s16
    %p22 = scmp.ge.s32.totalorder %s21, 2
    %s23 = scalar_select %p22, 0, %s21
    %s24 = sadd.s32 1, %s15
    %s25 = scalar_select %p22, %s24, %s15
    %p26 = scmp.ge.s32.totalorder %s25, 1
    %s27 = scalar_select %p26, 0, %s25
    %s28 = ssub.s32 %s15, %s27
    %s29 = ssub.s32 %s16, %s23
    %s30 = sor.u32 %s28, %s29
    %p31 = scmp.eq.s32.totalorder %s30, 0
    %s33 = sadd.s32 %s32, 1
    %s34 = scalar_select %p31, %s32, %s33
    %p37 = pneg %p31
    %p38 = scmp.eq.s32.totalorder %s8, 1
    %p39 = por %p37, %p38
    %p40 = scmp.ne.s32.totalorder %s32, %s35
    %p41 = scmp.eq.s32.totalorder %s8, 0
    %p42 = por %p40, %p41
    %p43 = scmp.ne.s32.totalorder %s32, %s35
    %p44 = scmp.eq.s32.totalorder %s13, 1
    %p45 = por %p43, %p44
    %p46 = scmp.ne.s32.totalorder %s35, %s36
    %p47 = scmp.eq.s32.totalorder %s13, 0
    %p48 = por %p46, %p47
    %p49 = scmp.ne.s32.totalorder %s35, %s36
    %p50 = scmp.eq.s32.totalorder %s14, 1
    %p51 = por %p49, %p50
    %p53 = scmp.ne.s32.totalorder %s36, %s52
    %p54 = scmp.eq.s32.totalorder %s14, 0
    %p55 = por %p53, %p54
    %s57 = sadd.s32 %s56, 1
    %p60 = scmp.eq.s32.totalorder %s8, 1
    %p61 = scmp.ne.s32.totalorder %s56, %s58
    %p62 = scmp.eq.s32.totalorder %s8, 0
    %p63 = por %p61, %p62
    %p64 = scmp.ne.s32.totalorder %s56, %s58
    %p65 = scmp.eq.s32.totalorder %s13, 1
    %p66 = por %p64, %p65
    %p67 = scmp.ne.s32.totalorder %s58, %s59
    %p68 = scmp.eq.s32.totalorder %s13, 0
    %p69 = por %p67, %p68
    %p70 = scmp.ne.s32.totalorder %s58, %s59
    %p71 = scmp.eq.s32.totalorder %s14, 1
    %p72 = por %p70, %p71
    %p74 = scmp.ne.s32.totalorder %s59, %s73
    %p75 = scmp.eq.s32.totalorder %s14, 0
    %p76 = por %p74, %p75
    %s77 = ssub.s32 %s15, %s27
    %s78 = ssub.s32 %s16, %s23
    %s79 = sor.u32 %s77, %s78
    %p80 = scmp.eq.s32.totalorder %s79, 0
    %s82 = sadd.s32 %s81, 1
    %s83 = scalar_select %p80, %s81, %s82
    %p86 = pneg %p80
    %p87 = scmp.eq.s32.totalorder %s8, 1
    %p88 = por %p86, %p87
    %p89 = scmp.ne.s32.totalorder %s81, %s84
    %p90 = scmp.eq.s32.totalorder %s8, 0
    %p91 = por %p89, %p90
    %p92 = scmp.ne.s32.totalorder %s81, %s84
    %p93 = scmp.eq.s32.totalorder %s13, 1
    %p94 = por %p92, %p93
    %p95 = scmp.ne.s32.totalorder %s84, %s85
    %p96 = scmp.eq.s32.totalorder %s13, 0
    %p97 = por %p95, %p96
    %p98 = scmp.ne.s32.totalorder %s84, %s85
    %p99 = scmp.eq.s32.totalorder %s14, 1
    %p100 = por %p98, %p99
    %p102 = scmp.ne.s32.totalorder %s85, %s101
    %p103 = scmp.eq.s32.totalorder %s14, 0
    %p104 = por %p102, %p103
    %p105 = scmp.le.s32.totalorder 1, %s8
    %p106 = scmp.lt.s32.totalorder %s8, 3
    %p107 = pnand %p105, %p106
    %p108 = pneg %p107
    // Predicated region
    $region9: #{my_lstm_forward.1} parent=5 // pred_check
      _
    $region10: #{my_lstm_forward.1} parent=5 // pred_check_branch
      %110 = sbr.rel (%p107) target = $region12
    $region11: #{my_lstm_forward.1} parent=5 // pred_region
      %s111 = ssub.s32 %s8, 1
      // Predicated region
      $region13: #{my_lstm_forward.1} parent=11 // pred_check
        %p112 = pneg %p69
      $region14: #{my_lstm_forward.1} parent=11 // pred_check_branch
        %114 = sbr.rel (%p112) target = $region16
      $region15: #{my_lstm_forward.1} parent=11 // pred_region
        _
      $region16: #{my_lstm_forward.1} parent=11 // pred_fallthru
        _
    $region12: #{my_lstm_forward.1} parent=5 // pred_fallthru
      _
    %p115 = scmp.lt.s32.totalorder %s8, 2
    // Predicated region
    $region17: #{my_lstm_forward.1} parent=5 // pred_check
      %p116 = pneg %p115
    $region18: #{my_lstm_forward.1} parent=5 // pred_check_branch
      %118 = sbr.rel (%p116) target = $region20
    $region19: #{my_lstm_forward.1} parent=5 // pred_region
      // Predicated region
      $region21: #{my_lstm_forward.1} parent=19 // pred_check
        %p119 = pneg %p42
      $region22: #{my_lstm_forward.1} parent=19 // pred_check_branch
        %121 = sbr.rel (%p119) target = $region24
      $region23: #{my_lstm_forward.1} parent=19 // pred_region
        %s122 = smul.u32 12, %s16
        %p123 = scmp.lt.s32.totalorder %s15, 0
        %s124 = scalar_select %p123, %s15, 0
        %p125 = scmp.lt.s32.totalorder %s122, 23
        %s126 = scalar_select %p125, %s122, 23
        %s127 = smul.addr %s124, 24
        %s128 = sadd.s32 %s126, %s127
        %s129 = smul.addr %s128, 4
        %s130 = scalar_lea.vmem %s0, %s129
        %s131 = smul.u32 12, %s16
      $region24: #{my_lstm_forward.1} parent=19 // pred_fallthru
        _
    $region20: #{my_lstm_forward.1} parent=5 // pred_fallthru
      _
    %p132 = scmp.le.s32.totalorder 1, %s8
    %p133 = scmp.lt.s32.totalorder %s8, 3
    %p134 = pnand %p132, %p133
    %p135 = pneg %p134
    // Predicated region
    $region25: #{my_lstm_forward.1} parent=5 // pred_check
      _
    $region26: #{my_lstm_forward.1} parent=5 // pred_check_branch
      %137 = sbr.rel (%p134) target = $region28
    $region27: #{my_lstm_forward.1} parent=5 // pred_region
      %s138 = ssub.s32 %s8, 1
      %s139 = smul.u32 12, %s18
      %p140 = scmp.lt.s32.totalorder %s17, 0
      %s141 = scalar_select %p140, %s17, 0
      %p142 = scmp.lt.s32.totalorder %s139, 23
      %s143 = scalar_select %p142, %s139, 23
      %s144 = smul.addr %s141, 24
      %s145 = sadd.s32 %s143, %s144
      %s146 = smul.addr %s145, 4
      %s147 = scalar_lea.vmem %s0, %s146
      %p148 = pneg %p48
      %p149 = pneg %p45
      %p150 = pneg %p69
      %p151 = pneg %p66
      %p152 = pneg %p97
      %p153 = pneg %p94
      %s154 = smul.u32 2, %s18
      %p155 = scmp.lt.s32.totalorder %s17, 0
      %s156 = scalar_select %p155, %s17, 0
      %p157 = scmp.lt.s32.totalorder %s154, 3
      %s158 = scalar_select %p157, %s154, 3
      %s159 = smul.addr %s156, 4
      %s160 = sadd.s32 %s158, %s159
      %s161 = smul.addr %s160, 8
      %s162 = scalar_lea.vmem %s2, %s161
      %s163 = smul.u32 12, %s18
      %p164 = scmp.lt.s32.totalorder %s17, 0
      %s165 = scalar_select %p164, %s17, 0
      %p166 = scmp.lt.s32.totalorder %s163, 23
      %s167 = scalar_select %p166, %s163, 23
      %s168 = smul.addr %s165, 24
      %s169 = sadd.s32 %s167, %s168
      %s170 = smul.addr %s169, 4
      %s171 = scalar_lea.vmem %s0, %s170
      %s172 = smul.u32 12, %s18
      %s173 = smul.u32 2, %s18
      %p174 = scmp.lt.s32.totalorder %s17, 0
      %s175 = scalar_select %p174, %s17, 0
      %p176 = scmp.lt.s32.totalorder %s173, 3
      %s177 = scalar_select %p176, %s173, 3
      %s178 = smul.addr %s175, 4
      %s179 = sadd.s32 %s177, %s178
      %s180 = smul.addr %s179, 8
      %s181 = scalar_lea.vmem %s2, %s180
      %s182 = smul.u32 2, %s18
      %p184 = scmp.eq.s32.totalorder %s18, 0
      // Predicated region
      $region29: #{my_lstm_forward.1} parent=27 // pred_check
        %p185 = pneg %p184
      $region30: #{my_lstm_forward.1} parent=27 // pred_check_branch
        %187 = sbr.rel (%p185) target = $region32
      $region31: #{my_lstm_forward.1} parent=27 // pred_region
        %vm188 = vcmask 261120
        %189 = vst.msk [vmem:[#allocation2] sm:$0xff] %vm188, 0.0
        %190 = vst.msk [vmem:[#allocation3] sm:$0xff] %vm188, 0.0
      $region32: #{my_lstm_forward.1} parent=27 // pred_fallthru
        _
      %v191 = vld [vmem:[#allocation2] sm:$0xff]
      %v192 = vld [vmem:[#allocation3] sm:$0xff]
      %v193 = vld [vmem:[%s1] sm:$0xff]
      %v194 = vld [vmem:[%s1 + $0x8] sm:$0xff]
      %v195 = vld [vmem:[%s1 + $0x10] sm:$0xff]
      %v196 = vld [vmem:[%s1 + $0x18] sm:$0xff]
      %v197 = vpack.c.bf16 %v191, %v191
      %v198 = vld [vmem:[%s171] sm:$0xff]
      %v199 = vunpack.c.l.bf16 %v198
      %v200 = vunpack.c.h.bf16 %v198
      %v205 = vunpack.c.l.b16 %v193
      %v206 = vunpack.c.h.b16 %v193
      %v207 = vunpack.c.l.b16 %v194
      %v208 = vunpack.c.h.b16 %v194
      %v209 = vunpack.c.l.b16 %v195
      %v210 = vunpack.c.h.b16 %v195
      %v211 = vunpack.c.l.b16 %v196
      %v212 = vunpack.c.h.b16 %v196
      %v213 = vpack.c.b16 %v207, %v205
      %v214 = vpack.c.b16 %v208, %v206
      %v215 = vpack.c.b16 %v211, %v209
      %v216 = vpack.c.b16 %v212, %v210
      %vm221 = vcmask 261120
      %v223 = vsel %vm221, %v197, 0
      %225 = vmatpush.bf16.msra.mxu0 0
      %226 = vmatpush.bf16.msra.mxu0 0
      %227 = vmatpush.bf16.msra.mxu0 0
      %228 = vmatpush.bf16.msra.mxu0 0
      %229 = vmatpush.bf16.msra.mxu0 0
      %230 = vmatpush.bf16.msra.mxu0 0
      %231 = vmatpush.bf16.msra.mxu0 %v215
      %232 = vmatpush.bf16.msra.mxu0 %v213
      %233 = vmatmul.bf16.gmra.mxu0 %v223
      %v234 = vpop.f32.mrf.mxu0
      %v235 = vadd.f32 %v199, %v234
      %v236 = vpop.f32.mrf.mxu0
      %237 = vdwg.mxu0
      %238 = vmatpush.bf16.msra.mxu0 0
      %239 = vmatpush.bf16.msra.mxu0 0
      %240 = vmatpush.bf16.msra.mxu0 0
      %241 = vmatpush.bf16.msra.mxu0 0
      %242 = vmatpush.bf16.msra.mxu0 0
      %243 = vmatpush.bf16.msra.mxu0 0
      %244 = vmatpush.bf16.msra.mxu0 %v216
      %245 = vmatpush.bf16.msra.mxu0 %v214
      %246 = vmatmul.bf16.gmra.mxu0 %v223
      %v247 = vpop.f32.mrf.mxu0
      %v248 = vadd.f32 %v200, %v247
      %v249 = vpop.f32.mrf.mxu0
      %250 = vdwg.mxu0
      %v251 = vmul.f32 %v235, 0.5
      %v252 = vtanh.pop %v251
      %v253 = vadd.f32 %v252, 1.0
      %v254 = vmul.f32 %v253, 0.5
      %v255 = vtanh.pop %v235
      %v256 = vmul.f32 %v248, 0.5
      %v257 = vtanh.pop %v256
      %v258 = vadd.f32 %v257, 1.0
      %v259 = vmul.f32 %v258, 0.5
      %v260 = vtanh.pop %v248
      %262 = vrot.lane.b32.xlu0 %v255, 32
      %v263 = vpop.permute.xlu0 %262
      %v265 = vmul.f32 %v254, %v263
      %267 = vrot.lane.b32.xlu0 %v260, 96
      %v268 = vpop.permute.xlu0 %267
      %v270 = vmul.f32 %v259, %v268
      %v271 = vadd.f32 %v265, %v270
      %273 = vrot.lane.b32.xlu0 %v192, 64
      %v274 = vpop.permute.xlu0 %273
      %v276 = vmul.f32 %v254, %v274
      %278 = vrot.lane.b32.xlu0 %v276, 64
      %v279 = vpop.permute.xlu0 %278
      %v281 = vadd.f32 %v271, %v279
      %v282 = vtanh.pop %v281
      %284 = vrot.lane.b32.xlu0 %v282, 32
      %v285 = vpop.permute.xlu0 %284
      %v287 = vmul.f32 %v254, %v285
      %289 = vrot.lane.b32.xlu0 %v287, 96
      %v290 = vpop.permute.xlu0 %289
      %292 = vst.msk [vmem:[%s181] sm:$0xff] %vm221, %v290
      %v293 = vpack.c.bf16 %v287, %v287
      %v294 = vld [vmem:[%s171 + $0x4] sm:$0xff]
      %v295 = vunpack.c.l.bf16 %v294
      %v296 = vunpack.c.h.bf16 %v294
      %298 = vrot.lane.b32.xlu0 %v293, 96
      %v299 = vpop.permute.xlu0 %298
      %302 = vrot.lane.b32.xlu0 %v295, 64
      %v303 = vpop.permute.xlu0 %302
      %304 = vrot.lane.b32.xlu0 %v296, 64
      %v305 = vpop.permute.xlu0 %304
      %vm306 = vcmask 523264
      %v307 = vsel %vm306, %v303, %v305
      %v311 = vsel %vm221, %v299, 0
      %313 = vmatpush.bf16.msra.mxu0 0
      %314 = vmatpush.bf16.msra.mxu0 0
      %315 = vmatpush.bf16.msra.mxu0 0
      %316 = vmatpush.bf16.msra.mxu0 0
      %317 = vmatpush.bf16.msra.mxu0 0
      %318 = vmatpush.bf16.msra.mxu0 0
      %319 = vmatpush.bf16.msra.mxu0 %v215
      %320 = vmatpush.bf16.msra.mxu0 %v213
      %321 = vmatmul.bf16.gmra.mxu0 %v311
      %v322 = vpop.f32.mrf.mxu0
      %v323 = vadd.f32 %v307, %v322
      %v324 = vpop.f32.mrf.mxu0
      %325 = vdwg.mxu0
      %326 = vmatpush.bf16.msra.mxu0 0
      %327 = vmatpush.bf16.msra.mxu0 0
      %328 = vmatpush.bf16.msra.mxu0 0
      %329 = vmatpush.bf16.msra.mxu0 0
      %330 = vmatpush.bf16.msra.mxu0 0
      %331 = vmatpush.bf16.msra.mxu0 0
      %332 = vmatpush.bf16.msra.mxu0 %v216
      %333 = vmatpush.bf16.msra.mxu0 %v214
      %334 = vmatmul.bf16.gmra.mxu0 %v311
      %v335 = vpop.f32.mrf.mxu0
      %v336 = vadd.f32 %v305, %v335
      %v337 = vpop.f32.mrf.mxu0
      %338 = vdwg.mxu0
      %v339 = vmul.f32 %v323, 0.5
      %v340 = vtanh.pop %v339
      %v341 = vadd.f32 %v340, 1.0
      %v342 = vmul.f32 %v341, 0.5
      %v343 = vtanh.pop %v323
      %v344 = vmul.f32 %v336, 0.5
      %v345 = vtanh.pop %v344
      %v346 = vadd.f32 %v345, 1.0
      %v347 = vmul.f32 %v346, 0.5
      %v348 = vtanh.pop %v336
      %350 = vrot.lane.b32.xlu0 %v343, 32
      %v351 = vpop.permute.xlu0 %350
      %v353 = vmul.f32 %v342, %v351
      %355 = vrot.lane.b32.xlu0 %v348, 96
      %v356 = vpop.permute.xlu0 %355
      %v358 = vmul.f32 %v347, %v356
      %v359 = vadd.f32 %v353, %v358
      %361 = vrot.lane.b32.xlu0 %v281, 64
      %v362 = vpop.permute.xlu0 %361
      %v364 = vmul.f32 %v342, %v362
      %366 = vrot.lane.b32.xlu0 %v364, 64
      %v367 = vpop.permute.xlu0 %366
      %v369 = vadd.f32 %v359, %v367
      %v370 = vtanh.pop %v369
      %372 = vrot.lane.b32.xlu0 %v370, 32
      %v373 = vpop.permute.xlu0 %372
      %v375 = vmul.f32 %v342, %v373
      %vm376 = vcmask 523520
      %377 = vst.msk [vmem:[%s181] sm:$0xff] %vm376, %v375
      %v378 = vpack.c.bf16 %v375, %v375
      %v379 = vld [vmem:[%s171 + $0xc] sm:$0xff]
      %v380 = vunpack.c.l.bf16 %v379
      %v381 = vunpack.c.h.bf16 %v379
      %383 = vrot.lane.b32.xlu0 %v378, 96
      %v384 = vpop.permute.xlu0 %383
      %v386 = vsel %vm221, %v384, 0
      %388 = vmatpush.bf16.msra.mxu0 0
      %389 = vmatpush.bf16.msra.mxu0 0
      %390 = vmatpush.bf16.msra.mxu0 0
      %391 = vmatpush.bf16.msra.mxu0 0
      %392 = vmatpush.bf16.msra.mxu0 0
      %393 = vmatpush.bf16.msra.mxu0 0
      %394 = vmatpush.bf16.msra.mxu0 %v215
      %395 = vmatpush.bf16.msra.mxu0 %v213
      %396 = vmatmul.bf16.gmra.mxu0 %v386
      %v397 = vpop.f32.mrf.mxu0
      %v398 = vadd.f32 %v380, %v397
      %v399 = vpop.f32.mrf.mxu0
      %400 = vdwg.mxu0
      %401 = vmatpush.bf16.msra.mxu0 0
      %402 = vmatpush.bf16.msra.mxu0 0
      %403 = vmatpush.bf16.msra.mxu0 0
      %404 = vmatpush.bf16.msra.mxu0 0
      %405 = vmatpush.bf16.msra.mxu0 0
      %406 = vmatpush.bf16.msra.mxu0 0
      %407 = vmatpush.bf16.msra.mxu0 %v216
      %408 = vmatpush.bf16.msra.mxu0 %v214
      %409 = vmatmul.bf16.gmra.mxu0 %v386
      %v410 = vpop.f32.mrf.mxu0
      %v411 = vadd.f32 %v381, %v410
      %v412 = vpop.f32.mrf.mxu0
      %413 = vdwg.mxu0
      %v414 = vmul.f32 %v398, 0.5
      %v415 = vtanh.pop %v414
      %v416 = vadd.f32 %v415, 1.0
      %v417 = vmul.f32 %v416, 0.5
      %v418 = vtanh.pop %v398
      %v419 = vmul.f32 %v411, 0.5
      %v420 = vtanh.pop %v419
      %v421 = vadd.f32 %v420, 1.0
      %v422 = vmul.f32 %v421, 0.5
      %v423 = vtanh.pop %v411
      %425 = vrot.lane.b32.xlu0 %v418, 32
      %v426 = vpop.permute.xlu0 %425
      %v428 = vmul.f32 %v417, %v426
      %430 = vrot.lane.b32.xlu0 %v423, 96
      %v431 = vpop.permute.xlu0 %430
      %v433 = vmul.f32 %v422, %v431
      %v434 = vadd.f32 %v428, %v433
      %436 = vrot.lane.b32.xlu0 %v369, 64
      %v437 = vpop.permute.xlu0 %436
      %v439 = vmul.f32 %v417, %v437
      %441 = vrot.lane.b32.xlu0 %v439, 64
      %v442 = vpop.permute.xlu0 %441
      %v444 = vadd.f32 %v434, %v442
      %v445 = vtanh.pop %v444
      %447 = vrot.lane.b32.xlu0 %v445, 32
      %v448 = vpop.permute.xlu0 %447
      %v450 = vmul.f32 %v417, %v448
      %452 = vrot.lane.b32.xlu0 %v450, 32
      %v453 = vpop.permute.xlu0 %452
      %vm455 = vcmask 785920
      %456 = vst.msk [vmem:[%s181] sm:$0xff] %vm455, %v453
      %v457 = vpack.c.bf16 %v450, %v450
      %v458 = vld [vmem:[%s171 + $0x10] sm:$0xff]
      %v459 = vunpack.c.l.bf16 %v458
      %v460 = vunpack.c.h.bf16 %v458
      %462 = vrot.lane.b32.xlu0 %v457, 96
      %v463 = vpop.permute.xlu0 %462
      %466 = vrot.lane.b32.xlu0 %v459, 64
      %v467 = vpop.permute.xlu0 %466
      %468 = vrot.lane.b32.xlu0 %v460, 64
      %v469 = vpop.permute.xlu0 %468
      %v470 = vsel %vm306, %v467, %v469
      %v474 = vsel %vm221, %v463, 0
      %476 = vmatpush.bf16.msra.mxu0 0
      %477 = vmatpush.bf16.msra.mxu0 0
      %478 = vmatpush.bf16.msra.mxu0 0
      %479 = vmatpush.bf16.msra.mxu0 0
      %480 = vmatpush.bf16.msra.mxu0 0
      %481 = vmatpush.bf16.msra.mxu0 0
      %482 = vmatpush.bf16.msra.mxu0 %v215
      %483 = vmatpush.bf16.msra.mxu0 %v213
      %484 = vmatmul.bf16.gmra.mxu0 %v474
      %v485 = vpop.f32.mrf.mxu0
      %v486 = vadd.f32 %v470, %v485
      %v487 = vpop.f32.mrf.mxu0
      %488 = vdwg.mxu0
      %489 = vmatpush.bf16.msra.mxu0 0
      %490 = vmatpush.bf16.msra.mxu0 0
      %491 = vmatpush.bf16.msra.mxu0 0
      %492 = vmatpush.bf16.msra.mxu0 0
      %493 = vmatpush.bf16.msra.mxu0 0
      %494 = vmatpush.bf16.msra.mxu0 0
      %495 = vmatpush.bf16.msra.mxu0 %v216
      %496 = vmatpush.bf16.msra.mxu0 %v214
      %497 = vmatmul.bf16.gmra.mxu0 %v474
      %v498 = vpop.f32.mrf.mxu0
      %v499 = vadd.f32 %v469, %v498
      %v500 = vpop.f32.mrf.mxu0
      %501 = vdwg.mxu0
      %v502 = vmul.f32 %v486, 0.5
      %v503 = vtanh.pop %v502
      %v504 = vadd.f32 %v503, 1.0
      %v505 = vmul.f32 %v504, 0.5
      %v506 = vtanh.pop %v486
      %v507 = vmul.f32 %v499, 0.5
      %v508 = vtanh.pop %v507
      %v509 = vadd.f32 %v508, 1.0
      %v510 = vmul.f32 %v509, 0.5
      %v511 = vtanh.pop %v499
      %513 = vrot.lane.b32.xlu0 %v506, 32
      %v514 = vpop.permute.xlu0 %513
      %v516 = vmul.f32 %v505, %v514
      %518 = vrot.lane.b32.xlu0 %v511, 96
      %v519 = vpop.permute.xlu0 %518
      %v521 = vmul.f32 %v510, %v519
      %v522 = vadd.f32 %v516, %v521
      %524 = vrot.lane.b32.xlu0 %v444, 64
      %v525 = vpop.permute.xlu0 %524
      %v527 = vmul.f32 %v505, %v525
      %529 = vrot.lane.b32.xlu0 %v527, 64
      %v530 = vpop.permute.xlu0 %529
      %v532 = vadd.f32 %v522, %v530
      %v533 = vtanh.pop %v532
      %535 = vrot.lane.b32.xlu0 %v533, 32
      %v536 = vpop.permute.xlu0 %535
      %v538 = vmul.f32 %v505, %v536
      %540 = vrot.lane.b32.xlu0 %v538, 64
      %v541 = vpop.permute.xlu0 %540
      %vm543 = vcmask 1048320
      %544 = vst.msk [vmem:[%s181] sm:$0xff] %vm543, %v541
      %v545 = vpack.c.bf16 %v538, %v538
      %v546 = vld [vmem:[%s171 + $0x18] sm:$0xff]
      %v547 = vunpack.c.l.bf16 %v546
      %v548 = vunpack.c.h.bf16 %v546
      %550 = vrot.lane.b32.xlu0 %v545, 96
      %v551 = vpop.permute.xlu0 %550
      %v553 = vsel %vm221, %v551, 0
      %555 = vmatpush.bf16.msra.mxu0 0
      %556 = vmatpush.bf16.msra.mxu0 0
      %557 = vmatpush.bf16.msra.mxu0 0
      %558 = vmatpush.bf16.msra.mxu0 0
      %559 = vmatpush.bf16.msra.mxu0 0
      %560 = vmatpush.bf16.msra.mxu0 0
      %561 = vmatpush.bf16.msra.mxu0 %v215
      %562 = vmatpush.bf16.msra.mxu0 %v213
      %563 = vmatmul.bf16.gmra.mxu0 %v553
      %v564 = vpop.f32.mrf.mxu0
      %v565 = vadd.f32 %v547, %v564
      %v566 = vpop.f32.mrf.mxu0
      %567 = vdwg.mxu0
      %568 = vmatpush.bf16.msra.mxu0 0
      %569 = vmatpush.bf16.msra.mxu0 0
      %570 = vmatpush.bf16.msra.mxu0 0
      %571 = vmatpush.bf16.msra.mxu0 0
      %572 = vmatpush.bf16.msra.mxu0 0
      %573 = vmatpush.bf16.msra.mxu0 0
      %574 = vmatpush.bf16.msra.mxu0 %v216
      %575 = vmatpush.bf16.msra.mxu0 %v214
      %576 = vmatmul.bf16.gmra.mxu0 %v553
      %v577 = vpop.f32.mrf.mxu0
      %v578 = vadd.f32 %v548, %v577
      %v579 = vpop.f32.mrf.mxu0
      %580 = vdwg.mxu0
      %v581 = vmul.f32 %v565, 0.5
      %v582 = vtanh.pop %v581
      %v583 = vadd.f32 %v582, 1.0
      %v584 = vmul.f32 %v583, 0.5
      %v585 = vtanh.pop %v565
      %v586 = vmul.f32 %v578, 0.5
      %v587 = vtanh.pop %v586
      %v588 = vadd.f32 %v587, 1.0
      %v589 = vmul.f32 %v588, 0.5
      %v590 = vtanh.pop %v578
      %592 = vrot.lane.b32.xlu0 %v585, 32
      %v593 = vpop.permute.xlu0 %592
      %v595 = vmul.f32 %v584, %v593
      %597 = vrot.lane.b32.xlu0 %v590, 96
      %v598 = vpop.permute.xlu0 %597
      %v600 = vmul.f32 %v589, %v598
      %v601 = vadd.f32 %v595, %v600
      %603 = vrot.lane.b32.xlu0 %v532, 64
      %v604 = vpop.permute.xlu0 %603
      %v606 = vmul.f32 %v584, %v604
      %608 = vrot.lane.b32.xlu0 %v606, 64
      %v609 = vpop.permute.xlu0 %608
      %v611 = vadd.f32 %v601, %v609
      %v612 = vtanh.pop %v611
      %614 = vrot.lane.b32.xlu0 %v612, 32
      %v615 = vpop.permute.xlu0 %614
      %v617 = vmul.f32 %v584, %v615
      %619 = vrot.lane.b32.xlu0 %v617, 96
      %v620 = vpop.permute.xlu0 %619
      %622 = vst.msk [vmem:[%s181 + $0x8] sm:$0xff] %vm221, %v620
      %v623 = vpack.c.bf16 %v617, %v617
      %v624 = vld [vmem:[%s171 + $0x1c] sm:$0xff]
      %v625 = vunpack.c.l.bf16 %v624
      %v626 = vunpack.c.h.bf16 %v624
      %628 = vrot.lane.b32.xlu0 %v623, 96
      %v629 = vpop.permute.xlu0 %628
      %632 = vrot.lane.b32.xlu0 %v625, 64
      %v633 = vpop.permute.xlu0 %632
      %634 = vrot.lane.b32.xlu0 %v626, 64
      %v635 = vpop.permute.xlu0 %634
      %v636 = vsel %vm306, %v633, %v635
      %v640 = vsel %vm221, %v629, 0
      %642 = vmatpush.bf16.msra.mxu0 0
      %643 = vmatpush.bf16.msra.mxu0 0
      %644 = vmatpush.bf16.msra.mxu0 0
      %645 = vmatpush.bf16.msra.mxu0 0
      %646 = vmatpush.bf16.msra.mxu0 0
      %647 = vmatpush.bf16.msra.mxu0 0
      %648 = vmatpush.bf16.msra.mxu0 %v215
      %649 = vmatpush.bf16.msra.mxu0 %v213
      %650 = vmatmul.bf16.gmra.mxu0 %v640
      %v651 = vpop.f32.mrf.mxu0
      %v652 = vadd.f32 %v636, %v651
      %v653 = vpop.f32.mrf.mxu0
      %654 = vdwg.mxu0
      %655 = vmatpush.bf16.msra.mxu0 0
      %656 = vmatpush.bf16.msra.mxu0 0
      %657 = vmatpush.bf16.msra.mxu0 0
      %658 = vmatpush.bf16.msra.mxu0 0
      %659 = vmatpush.bf16.msra.mxu0 0
      %660 = vmatpush.bf16.msra.mxu0 0
      %661 = vmatpush.bf16.msra.mxu0 %v216
      %662 = vmatpush.bf16.msra.mxu0 %v214
      %663 = vmatmul.bf16.gmra.mxu0 %v640
      %v664 = vpop.f32.mrf.mxu0
      %v665 = vadd.f32 %v635, %v664
      %v666 = vpop.f32.mrf.mxu0
      %667 = vdwg.mxu0
      %v668 = vmul.f32 %v652, 0.5
      %v669 = vtanh.pop %v668
      %v670 = vadd.f32 %v669, 1.0
      %v671 = vmul.f32 %v670, 0.5
      %v672 = vtanh.pop %v652
      %v673 = vmul.f32 %v665, 0.5
      %v674 = vtanh.pop %v673
      %v675 = vadd.f32 %v674, 1.0
      %v676 = vmul.f32 %v675, 0.5
      %v677 = vtanh.pop %v665
      %679 = vrot.lane.b32.xlu0 %v672, 32
      %v680 = vpop.permute.xlu0 %679
      %v682 = vmul.f32 %v671, %v680
      %684 = vrot.lane.b32.xlu0 %v677, 96
      %v685 = vpop.permute.xlu0 %684
      %v687 = vmul.f32 %v676, %v685
      %v688 = vadd.f32 %v682, %v687
      %690 = vrot.lane.b32.xlu0 %v611, 64
      %v691 = vpop.permute.xlu0 %690
      %v693 = vmul.f32 %v671, %v691
      %695 = vrot.lane.b32.xlu0 %v693, 64
      %v696 = vpop.permute.xlu0 %695
      %v698 = vadd.f32 %v688, %v696
      %v699 = vtanh.pop %v698
      %701 = vrot.lane.b32.xlu0 %v699, 32
      %v702 = vpop.permute.xlu0 %701
      %v704 = vmul.f32 %v671, %v702
      %705 = vst.msk [vmem:[%s181 + $0x8] sm:$0xff] %vm376, %v704
      %v706 = vpack.c.bf16 %v704, %v704
      %v707 = vld [vmem:[%s171 + $0x24] sm:$0xff]
      %v708 = vunpack.c.l.bf16 %v707
      %v709 = vunpack.c.h.bf16 %v707
      %711 = vrot.lane.b32.xlu0 %v706, 96
      %v712 = vpop.permute.xlu0 %711
      %v714 = vsel %vm221, %v712, 0
      %716 = vmatpush.bf16.msra.mxu0 0
      %717 = vmatpush.bf16.msra.mxu0 0
      %718 = vmatpush.bf16.msra.mxu0 0
      %719 = vmatpush.bf16.msra.mxu0 0
      %720 = vmatpush.bf16.msra.mxu0 0
      %721 = vmatpush.bf16.msra.mxu0 0
      %722 = vmatpush.bf16.msra.mxu0 %v215
      %723 = vmatpush.bf16.msra.mxu0 %v213
      %724 = vmatmul.bf16.gmra.mxu0 %v714
      %v725 = vpop.f32.mrf.mxu0
      %v726 = vadd.f32 %v708, %v725
      %v727 = vpop.f32.mrf.mxu0
      %728 = vdwg.mxu0
      %729 = vmatpush.bf16.msra.mxu0 0
      %730 = vmatpush.bf16.msra.mxu0 0
      %731 = vmatpush.bf16.msra.mxu0 0
      %732 = vmatpush.bf16.msra.mxu0 0
      %733 = vmatpush.bf16.msra.mxu0 0
      %734 = vmatpush.bf16.msra.mxu0 0
      %735 = vmatpush.bf16.msra.mxu0 %v216
      %736 = vmatpush.bf16.msra.mxu0 %v214
      %737 = vmatmul.bf16.gmra.mxu0 %v714
      %v738 = vpop.f32.mrf.mxu0
      %v739 = vadd.f32 %v709, %v738
      %v740 = vpop.f32.mrf.mxu0
      %741 = vdwg.mxu0
      %v742 = vmul.f32 %v726, 0.5
      %v743 = vtanh.pop %v742
      %v744 = vadd.f32 %v743, 1.0
      %v745 = vmul.f32 %v744, 0.5
      %v746 = vtanh.pop %v726
      %v747 = vmul.f32 %v739, 0.5
      %v748 = vtanh.pop %v747
      %v749 = vadd.f32 %v748, 1.0
      %v750 = vmul.f32 %v749, 0.5
      %v751 = vtanh.pop %v739
      %753 = vrot.lane.b32.xlu0 %v746, 32
      %v754 = vpop.permute.xlu0 %753
      %v756 = vmul.f32 %v745, %v754
      %758 = vrot.lane.b32.xlu0 %v751, 96
      %v759 = vpop.permute.xlu0 %758
      %v761 = vmul.f32 %v750, %v759
      %v762 = vadd.f32 %v756, %v761
      %764 = vrot.lane.b32.xlu0 %v698, 64
      %v765 = vpop.permute.xlu0 %764
      %v767 = vmul.f32 %v745, %v765
      %769 = vrot.lane.b32.xlu0 %v767, 64
      %v770 = vpop.permute.xlu0 %769
      %v772 = vadd.f32 %v762, %v770
      %v773 = vtanh.pop %v772
      %775 = vrot.lane.b32.xlu0 %v773, 32
      %v776 = vpop.permute.xlu0 %775
      %v778 = vmul.f32 %v745, %v776
      %780 = vrot.lane.b32.xlu0 %v778, 32
      %v781 = vpop.permute.xlu0 %780
      %783 = vst.msk [vmem:[%s181 + $0x8] sm:$0xff] %vm455, %v781
      %v784 = vpack.c.bf16 %v778, %v778
      %v785 = vld [vmem:[%s171 + $0x28] sm:$0xff]
      %v786 = vunpack.c.l.bf16 %v785
      %v787 = vunpack.c.h.bf16 %v785
      %789 = vrot.lane.b32.xlu0 %v784, 96
      %v790 = vpop.permute.xlu0 %789
      %793 = vrot.lane.b32.xlu0 %v786, 64
      %v794 = vpop.permute.xlu0 %793
      %795 = vrot.lane.b32.xlu0 %v787, 64
      %v796 = vpop.permute.xlu0 %795
      %v797 = vsel %vm306, %v794, %v796
      %v801 = vsel %vm221, %v790, 0
      %803 = vmatpush.bf16.msra.mxu0 0
      %804 = vmatpush.bf16.msra.mxu0 0
      %805 = vmatpush.bf16.msra.mxu0 0
      %806 = vmatpush.bf16.msra.mxu0 0
      %807 = vmatpush.bf16.msra.mxu0 0
      %808 = vmatpush.bf16.msra.mxu0 0
      %809 = vmatpush.bf16.msra.mxu0 %v215
      %810 = vmatpush.bf16.msra.mxu0 %v213
      %811 = vmatmul.bf16.gmra.mxu0 %v801
      %v812 = vpop.f32.mrf.mxu0
      %v813 = vadd.f32 %v797, %v812
      %v814 = vpop.f32.mrf.mxu0
      %815 = vdwg.mxu0
      %816 = vmatpush.bf16.msra.mxu0 0
      %817 = vmatpush.bf16.msra.mxu0 0
      %818 = vmatpush.bf16.msra.mxu0 0
      %819 = vmatpush.bf16.msra.mxu0 0
      %820 = vmatpush.bf16.msra.mxu0 0
      %821 = vmatpush.bf16.msra.mxu0 0
      %822 = vmatpush.bf16.msra.mxu0 %v216
      %823 = vmatpush.bf16.msra.mxu0 %v214
      %824 = vmatmul.bf16.gmra.mxu0 %v801
      %v825 = vpop.f32.mrf.mxu0
      %v826 = vadd.f32 %v796, %v825
      %v827 = vpop.f32.mrf.mxu0
      %828 = vdwg.mxu0
      %v829 = vmul.f32 %v813, 0.5
      %v830 = vtanh.pop %v829
      %v831 = vadd.f32 %v830, 1.0
      %v832 = vmul.f32 %v831, 0.5
      %v833 = vtanh.pop %v813
      %v834 = vmul.f32 %v826, 0.5
      %v835 = vtanh.pop %v834
      %v836 = vadd.f32 %v835, 1.0
      %v837 = vmul.f32 %v836, 0.5
      %v838 = vtanh.pop %v826
      %840 = vrot.lane.b32.xlu0 %v833, 32
      %v841 = vpop.permute.xlu0 %840
      %v843 = vmul.f32 %v832, %v841
      %845 = vrot.lane.b32.xlu0 %v838, 96
      %v846 = vpop.permute.xlu0 %845
      %v848 = vmul.f32 %v837, %v846
      %v849 = vadd.f32 %v843, %v848
      %851 = vrot.lane.b32.xlu0 %v772, 64
      %v852 = vpop.permute.xlu0 %851
      %v854 = vmul.f32 %v832, %v852
      %856 = vrot.lane.b32.xlu0 %v854, 64
      %v857 = vpop.permute.xlu0 %856
      %v859 = vadd.f32 %v849, %v857
      %v860 = vtanh.pop %v859
      %862 = vrot.lane.b32.xlu0 %v860, 32
      %v863 = vpop.permute.xlu0 %862
      %v865 = vmul.f32 %v832, %v863
      %867 = vrot.lane.b32.xlu0 %v865, 64
      %v868 = vpop.permute.xlu0 %867
      %870 = vst.msk [vmem:[%s181 + $0x8] sm:$0xff] %vm543, %v868
      %871 = vrot.lane.b32.xlu0 %v865, 96
      %v872 = vpop.permute.xlu0 %871
      %874 = vst.msk [vmem:[#allocation2] sm:$0xff] %vm221, %v872
      %875 = vst.msk [vmem:[#allocation3] sm:$0xff] %vm221, %v859
      %s876 = smul.u32 2, %s18
      %p877 = scmp.lt.s32.totalorder %s17, 0
      %s878 = scalar_select %p877, %s17, 0
      %p879 = scmp.lt.s32.totalorder %s876, 3
      %s880 = scalar_select %p879, %s876, 3
      %s881 = smul.addr %s878, 4
      %s882 = sadd.s32 %s880, %s881
      %s883 = smul.addr %s882, 8
      %s884 = scalar_lea.vmem %s2, %s883
      // Predicated region
      $region33: #{my_lstm_forward.1} parent=27 // pred_check
        %p885 = pneg %p94
      $region34: #{my_lstm_forward.1} parent=27 // pred_check_branch
        %887 = sbr.rel (%p885) target = $region36
      $region35: #{my_lstm_forward.1} parent=27 // pred_region
        %s888 = smul.u32 2, %s18
      $region36: #{my_lstm_forward.1} parent=27 // pred_fallthru
        _
    $region28: #{my_lstm_forward.1} parent=5 // pred_fallthru
      _
    %p889 = scmp.le.s32.totalorder 2, %s8
    // Predicated region
    $region37: #{my_lstm_forward.1} parent=5 // pred_check
      %p890 = pneg %p889
    $region38: #{my_lstm_forward.1} parent=5 // pred_check_branch
      %892 = sbr.rel (%p890) target = $region40
    $region39: #{my_lstm_forward.1} parent=5 // pred_region
      %s893 = ssub.s32 %s8, 2
      // Predicated region
      $region41: #{my_lstm_forward.1} parent=39 // pred_check
        %p894 = pneg %p100
      $region42: #{my_lstm_forward.1} parent=39 // pred_check_branch
        %896 = sbr.rel (%p894) target = $region44
      $region43: #{my_lstm_forward.1} parent=39 // pred_region
        %s897 = smul.u32 2, %s20
        %p898 = scmp.lt.s32.totalorder %s19, 0
        %s899 = scalar_select %p898, %s19, 0
        %p900 = scmp.lt.s32.totalorder %s897, 3
        %s901 = scalar_select %p900, %s897, 3
        %s902 = smul.addr %s899, 4
        %s903 = sadd.s32 %s901, %s902
        %s904 = smul.addr %s903, 8
        %s905 = scalar_lea.vmem %s2, %s904
      $region44: #{my_lstm_forward.1} parent=39 // pred_fallthru
        _
    $region40: #{my_lstm_forward.1} parent=5 // pred_fallthru
      _
  $region6: #{my_lstm_forward.1} parent=0 // loop_footer
    %s12 = sadd.s32 1, %s8
  $region7: #{my_lstm_forward.1} parent=0 // loop_footer_branch
    %7 = sbr.rel target = $region3
  $region8: #{my_lstm_forward.1} parent=0 // loop_exit
    _

</llo_original>
